<compile_context>
chip_gen: v7x
topology: tpu7x:2x2x1
jax: 0.10.0
libtpu: 0.0.40
codegen_flags: <defaults>
</compile_context>

<pallas_src>
import jax
import jax.numpy as jnp
import numpy as np
from jax.experimental import pallas as pl
from jax.experimental.pallas import tpu as pltpu

# ----------------------------- configuration -------------------------------
LEVEL = 2           # -> n_vertex = 42  (allowed: 42, 642, 2562, 10242, ...)
N_SUB = 8
N_VERTEX = 42
CHS_0 = 256
CHS = [3, 8, 8, 2]
BN_EPS = 1e-5
LEAKY_SLOPE = 0.2
N_LAYERS = len(CHS) - 1


def _pad128(n):
    return ((n + 127) // 128) * 128


# Flat (vertex-major) activation widths after fc / conv0 / conv1 / conv2,
# and their 128-lane padded versions used inside the kernel.
WIDTHS = [CHS[i] * N_VERTEX for i in range(len(CHS))]   # 126, 336, 336, 84
WPAD = [_pad128(w) for w in WIDTHS]                     # 128, 384, 384, 128
PMAX = max(WPAD)                                        # 384


# ------------------------------- kernel ------------------------------------
def gen_phi_kernel(sub_ref, wc_ref, p_ref, m0_ref, m1_ref,
                   t0_ref, t1_ref, t2_ref, o_ref):
    """Fused forward: (fc_sub o fc) -> 3x (BatchNorm1d + LeakyReLU + 1-ring conv).

    The activation lives in VMEM as a flat (1, V*C) vertex-major row (the
    row-major order of torch.reshape), padded to a multiple of 128 lanes; pad
    lanes stay exactly zero throughout.  Each 1-ring conv is one MXU matmul
    against a host-folded (Wpad_in, Wpad_out) matrix that already contains the
    neighbour gather + per-neighbour Linear weights.
    """
    inv_v = 1.0 / float(N_VERTEX)

    # fc_sub o fc folded on host into one matmul (exact, no nonlinearity
    # between them); its bias is row 0 of the packed small-parameter table.
    x = jnp.dot(sub_ref[...], wc_ref[...],
                preferred_element_type=jnp.float32) + p_ref[0:1, 0:WPAD[0]]

    mask_refs = (m0_ref, m1_ref, m1_ref)      # layers 1 and 2 share one mask
    t_refs = (t0_ref, t1_ref, t2_ref)

    for li in range(N_LAYERS):                # static unroll (3 layers)
        w_in, w_out = WPAD[li], WPAD[li + 1]
        m = mask_refs[li][...]                              # (8, w_in) 0/1
        g_flat = p_ref[3 * li + 1:3 * li + 2, 0:w_in]       # BN gamma (flat)
        be_flat = p_ref[3 * li + 2:3 * li + 3, 0:w_in]      # BN beta  (flat)
        b_conv = p_ref[3 * li + 3:3 * li + 4, 0:w_out]      # conv bias (flat)

        # --- BatchNorm1d over the vertex axis (biased var, eps=1e-5) --------
        # One merged lane reduction for per-channel sum(x) and sum(x^2).
        xm = m * x                                           # (8, w_in)
        sums = jnp.sum(jnp.concatenate([xm, xm * x], axis=0),
                       axis=1, keepdims=True) * inv_v        # (16, 1)
        mean = sums[0:8]                                     # (8, 1)
        var = jnp.maximum(sums[8:16] - mean * mean, 0.0)     # guard cancellation
        s = jax.lax.rsqrt(var + BN_EPS)                      # (8, 1)
        # One merged sublane reduction broadcasting s and mean*s back to flat.
        bc = jnp.sum(jnp.concatenate([s * m, (mean * s) * m], axis=1),
                     axis=0, keepdims=True)                  # (1, 2*w_in)
        xn = (x * bc[:, 0:w_in] - bc[:, w_in:2 * w_in]) * g_flat + be_flat
        act = jnp.where(xn >= 0.0, xn, LEAKY_SLOPE * xn)     # LeakyReLU(0.2)

        # --- 1-ring conv: gather + Linear(7*Cin, Cout) as one matmul --------
        x = jnp.dot(act, t_refs[li][...],
                    preferred_element_type=jnp.float32) + b_conv

    o_ref[...] = x                 # (1, 128); lanes >= 84 are exactly zero


# ------------------------------ wrapper -------------------------------------
def _vmem_spec():
    return pl.BlockSpec(memory_space=pltpu.MemorySpace.VMEM)


@jax.jit
def gen_phi_forward(sub_id, kp):
    args = (sub_id, kp["w_comb"], kp["p_small"], kp["mask0"], kp["mask1"],
            kp["t0"], kp["t1"], kp["t2"])
    out_shape = jax.ShapeDtypeStruct((1, WPAD[-1]), jnp.float32)

    flops = 2 * (N_SUB * WPAD[0] + WPAD[0] * WPAD[1]
                 + WPAD[1] * WPAD[2] + WPAD[2] * WPAD[3])
    bytes_accessed = 4 * (sum(int(np.prod(a.shape)) for a in args) + WPAD[-1])

    y = pl.pallas_call(
        gen_phi_kernel,
        out_shape=out_shape,
        in_specs=[_vmem_spec() for _ in args],
        out_specs=_vmem_spec(),
        cost_estimate=pl.CostEstimate(flops=flops, transcendentals=32,
                                      bytes_accessed=bytes_accessed),
    )(*args)
    # (1, 128) -> drop lane padding -> (V, 2): trivial row-major reshape.
    return y[:, :WIDTHS[-1]].reshape(N_VERTEX, CHS[-1])


# --------------------------- parameter set-up --------------------------------
def make_params(key):
    """Torch-style parameters (used by the pure-JAX reference)."""
    ks = jax.random.split(key, 16)
    p = {}
    # fc_sub: Linear(n_sub, 256);  fc: Linear(256, 3*n_vertex)  (stored transposed)
    p["w_sub_t"] = 0.1 * jax.random.normal(ks[0], (N_SUB, CHS_0), jnp.float32)
    p["b_sub"] = 0.1 * jax.random.normal(ks[1], (1, CHS_0), jnp.float32)
    p["w_fc_t"] = 0.1 * jax.random.normal(
        ks[2], (CHS_0, CHS[0] * N_VERTEX), jnp.float32)
    p["b_fc"] = 0.1 * jax.random.normal(
        ks[3], (1, CHS[0] * N_VERTEX), jnp.float32)

    # Synthetic deterministic one-ring neighbour table: self + 6 neighbours.
    offsets = np.array([0, 1, 2, 3, -1, -2, -3], dtype=np.int64)
    neigh = (np.arange(N_VERTEX)[:, None] + offsets[None, :]) % N_VERTEX

    p["gamma"], p["beta"], p["w_conv"], p["b_conv"] = [], [], [], []
    for i in range(N_LAYERS):
        c_in, c_out = CHS[i], CHS[i + 1]
        # Non-default BN affine params so the gamma/beta folding is exercised.
        p["gamma"].append(1.0 + 0.1 * jax.random.normal(ks[4 + i], (1, c_in),
                                                        jnp.float32))
        p["beta"].append(0.1 * jax.random.normal(ks[7 + i], (1, c_in),
                                                 jnp.float32))
        # Linear(7*c_in, c_out) weight, stored as (7, c_in, c_out):
        #   w_conv[k, c, o] == torch_weight[o, k*c_in + c]
        p["w_conv"].append(0.1 * jax.random.normal(
            ks[10 + i], (7, c_in, c_out), jnp.float32))
        p["b_conv"].append(0.1 * jax.random.normal(
            ks[13 + i], (1, c_out), jnp.float32))
    return p, jnp.asarray(neigh.astype(np.int32))


def preprocess_params(p, neigh):
    """Host-side (one-time) folding:
       * fc_sub o fc composed into one (N_SUB, 128) matrix + flat bias,
       * fc bias / BN gamma / BN beta / conv biases packed into one (10, 384)
         table of flat vertex-major rows,
       * 8-row 0/1 channel-selector masks (layers 1 and 2 share one),
       * neighbour gather + per-neighbour conv weights folded into one
         (Wpad_in, Wpad_out) matrix per layer (pad rows/cols zero)."""
    neigh = np.asarray(neigh)
    kp = {}

    # Compose fc_sub and fc (exact: no nonlinearity between them).
    w_comb = np.asarray(p["w_sub_t"]) @ np.asarray(p["w_fc_t"])      # (8, 126)
    b_comb = (np.asarray(p["b_sub"]) @ np.asarray(p["w_fc_t"])
              + np.asarray(p["b_fc"]))                               # (1, 126)
    w_pad = np.zeros((N_SUB, WPAD[0]), np.float32)
    w_pad[:, :WIDTHS[0]] = w_comb
    kp["w_comb"] = jnp.asarray(w_pad)

    # Packed small-parameter table (one DMA instead of ten):
    #   row 0      : fc bias (flat)
    #   row 3*i+1  : gamma_flat of layer i
    #   row 3*i+2  : beta_flat  of layer i
    #   row 3*i+3  : conv bias_flat of layer i
    P = np.zeros((3 * N_LAYERS + 1, PMAX), np.float32)
    P[0, :WIDTHS[0]] = b_comb[0]
    for i in range(N_LAYERS):
        P[3 * i + 1, :WIDTHS[i]] = np.tile(
            np.asarray(p["gamma"][i]).reshape(-1), N_VERTEX)
        P[3 * i + 2, :WIDTHS[i]] = np.tile(
            np.asarray(p["beta"][i]).reshape(-1), N_VERTEX)
        P[3 * i + 3, :WIDTHS[i + 1]] = np.tile(
            np.asarray(p["b_conv"][i]).reshape(-1), N_VERTEX)
    kp["p_small"] = jnp.asarray(P)

    # Channel-selector masks: mask[c, v*Cin + c'] = 1 iff c == c' (8 rows,
    # zero at pad lanes and pad rows).  Layers 1 and 2 share mask1.
    def make_mask(c_in, width, wpad):
        m = np.zeros((8, wpad), np.float32)
        j = np.arange(width)
        m[j % c_in, j] = 1.0
        return m

    kp["mask0"] = jnp.asarray(make_mask(CHS[0], WIDTHS[0], WPAD[0]))
    kp["mask1"] = jnp.asarray(make_mask(CHS[1], WIDTHS[1], WPAD[1]))

    # Fold neighbour gather + per-neighbour Linear weights into one matrix.
    for i in range(N_LAYERS):
        c_in, c_out = CHS[i], CHS[i + 1]
        w = np.asarray(p["w_conv"][i])                   # (7, c_in, c_out)
        t = np.zeros((WPAD[i], WPAD[i + 1]), np.float32)
        for v in range(N_VERTEX):
            for k in range(7):
                u = int(neigh[v, k])
                t[u * c_in:(u + 1) * c_in,
                  v * c_out:(v + 1) * c_out] += w[k]
        kp[f"t{i}"] = jnp.asarray(t)
    return kp


# ------------------------- pure-JAX reference --------------------------------
def reference_forward(sub_id, params, neigh):
    h = sub_id @ params["w_sub_t"] + params["b_sub"]
    y = h @ params["w_fc_t"] + params["b_fc"]
    x = y.reshape(N_VERTEX, CHS[0])
    for i in range(N_LAYERS):
        mean = jnp.mean(x, axis=0, keepdims=True)
        var = jnp.mean((x - mean) ** 2, axis=0, keepdims=True)
        xn = (x - mean) / jnp.sqrt(var + BN_EPS)
        xn = xn * params["gamma"][i] + params["beta"][i]
        act = jnp.where(xn >= 0, xn, LEAKY_SLOPE * xn)
        gathered = act[neigh.reshape(-1)]                  # (7*V, Cin)
        mat = gathered.reshape(N_VERTEX, 7 * CHS[i])       # (V, 7*Cin)
        w_flat = params["w_conv"][i].reshape(7 * CHS[i], CHS[i + 1])
        x = mat @ w_flat + params["b_conv"][i]
    return x


# ---------------------------------- main --------------------------------------
if __name__ == "__main__":
    key = jax.random.PRNGKey(0)
    k_param, k_in = jax.random.split(key)
    params, neigh = make_params(k_param)
    kparams = preprocess_params(params, neigh)

    sub_id = jax.random.normal(k_in, (1, N_SUB), jnp.float32)

    out = jax.block_until_ready(gen_phi_forward(sub_id, kparams))
    assert out.shape == (N_VERTEX, CHS[-1]) and out.dtype == jnp.float32

    ref = reference_forward(sub_id, params, neigh)
    np.testing.assert_allclose(np.asarray(out), np.asarray(ref),
                               rtol=2e-3, atol=2e-3)

    print("KERNEL_OK")
</pallas_src>

<mosaic_0001>
module attributes {stable_mosaic.version = 11 : i64} {
  func.func @gen_phi_kernel(%arg0: memref<1x8xf32, #tpu.memory_space<vmem>>, %arg1: memref<8x128xf32, #tpu.memory_space<vmem>>, %arg2: memref<10x384xf32, #tpu.memory_space<vmem>>, %arg3: memref<8x128xf32, #tpu.memory_space<vmem>>, %arg4: memref<8x384xf32, #tpu.memory_space<vmem>>, %arg5: memref<128x384xf32, #tpu.memory_space<vmem>>, %arg6: memref<384x384xf32, #tpu.memory_space<vmem>>, %arg7: memref<384x128xf32, #tpu.memory_space<vmem>>, %arg8: memref<1x128xf32, #tpu.memory_space<vmem>>) attributes {dimension_semantics = [], scalar_prefetch = 0 : i64, scratch_operands = 0 : i64, tpu.core_type = #tpu.core_type<tc>} {
    %c0 = arith.constant 0 : index
    %c0_0 = arith.constant 0 : index
    %0 = vector.load %arg0[%c0, %c0_0] : memref<1x8xf32, #tpu.memory_space<vmem>>, vector<1x8xf32>
    %c0_1 = arith.constant 0 : index
    %c0_2 = arith.constant 0 : index
    %1 = vector.load %arg1[%c0_1, %c0_2] : memref<8x128xf32, #tpu.memory_space<vmem>>, vector<8x128xf32>
    %cst = arith.constant dense<0.000000e+00> : vector<1x128xf32>
    %2 = tpu.matmul %0, %1, %cst {dimension_numbers = #tpu.dot_dimension_numbers<[1], [0], [0], [1], [0, 0, 1, 1], [], []>} : vector<1x8xf32>, vector<8x128xf32>, vector<1x128xf32> -> vector<1x128xf32>
    %c0_3 = arith.constant 0 : index
    %c0_4 = arith.constant 0 : index
    %3 = vector.load %arg2[%c0_3, %c0_4] : memref<10x384xf32, #tpu.memory_space<vmem>>, vector<1x128xf32>
    %4 = arith.addf %2, %3 : vector<1x128xf32>
    %c0_5 = arith.constant 0 : index
    %c0_6 = arith.constant 0 : index
    %5 = vector.load %arg3[%c0_5, %c0_6] : memref<8x128xf32, #tpu.memory_space<vmem>>, vector<8x128xf32>
    %c1 = arith.constant 1 : index
    %c0_7 = arith.constant 0 : index
    %6 = vector.load %arg2[%c1, %c0_7] : memref<10x384xf32, #tpu.memory_space<vmem>>, vector<1x128xf32>
    %c2 = arith.constant 2 : index
    %c0_8 = arith.constant 0 : index
    %7 = vector.load %arg2[%c2, %c0_8] : memref<10x384xf32, #tpu.memory_space<vmem>>, vector<1x128xf32>
    %c3 = arith.constant 3 : index
    %c0_9 = arith.constant 0 : index
    %8 = vector.load %arg2[%c3, %c0_9] : memref<10x384xf32, #tpu.memory_space<vmem>>, vector<1x384xf32>
    %9 = vector.broadcast %4 : vector<1x128xf32> to vector<8x128xf32>
    %10 = arith.mulf %5, %9 : vector<8x128xf32>
    %11 = vector.broadcast %4 : vector<1x128xf32> to vector<8x128xf32>
    %12 = arith.mulf %10, %11 : vector<8x128xf32>
    %13 = tpu.concatenate %10, %12 in 0 : vector<8x128xf32>, vector<8x128xf32> -> vector<16x128xf32>
    %cst_10 = arith.constant dense<0.000000e+00> : vector<16xf32>
    %14 = vector.multi_reduction <add>, %13, %cst_10 [1] : vector<16x128xf32> to vector<16xf32>
    %15 = vector.shape_cast %14 : vector<16xf32> to vector<16x1xf32>
    %cst_11 = arith.constant 0.0238095243 : f32
    %16 = vector.broadcast %cst_11 : f32 to vector<16x1xf32>
    %17 = arith.mulf %15, %16 : vector<16x1xf32>
    %18 = vector.extract_strided_slice %17 {offsets = [0, 0], sizes = [8, 1], strides = [1, 1]} : vector<16x1xf32> to vector<8x1xf32>
    %19 = vector.extract_strided_slice %17 {offsets = [8, 0], sizes = [8, 1], strides = [1, 1]} : vector<16x1xf32> to vector<8x1xf32>
    %20 = arith.mulf %18, %18 : vector<8x1xf32>
    %21 = arith.subf %19, %20 : vector<8x1xf32>
    %cst_12 = arith.constant 0.000000e+00 : f32
    %22 = vector.broadcast %cst_12 : f32 to vector<8x1xf32>
    %23 = arith.maximumf %21, %22 : vector<8x1xf32>
    %cst_13 = arith.constant 9.99999974E-6 : f32
    %24 = vector.broadcast %cst_13 : f32 to vector<8x1xf32>
    %25 = arith.addf %23, %24 : vector<8x1xf32>
    %26 = math.rsqrt %25 : vector<8x1xf32>
    %27 = vector.broadcast %26 : vector<8x1xf32> to vector<8x128xf32>
    %28 = arith.mulf %27, %5 : vector<8x128xf32>
    %29 = arith.mulf %18, %26 : vector<8x1xf32>
    %30 = vector.broadcast %29 : vector<8x1xf32> to vector<8x128xf32>
    %31 = arith.mulf %30, %5 : vector<8x128xf32>
    %32 = tpu.concatenate %28, %31 in 1 : vector<8x128xf32>, vector<8x128xf32> -> vector<8x256xf32>
    %cst_14 = arith.constant dense<0.000000e+00> : vector<256xf32>
    %33 = vector.multi_reduction <add>, %32, %cst_14 [0] : vector<8x256xf32> to vector<256xf32>
    %34 = vector.shape_cast %33 : vector<256xf32> to vector<1x256xf32>
    %35 = vector.extract_strided_slice %34 {offsets = [0, 0], sizes = [1, 128], strides = [1, 1]} : vector<1x256xf32> to vector<1x128xf32>
    %36 = arith.mulf %4, %35 : vector<1x128xf32>
    %37 = vector.extract_strided_slice %34 {offsets = [0, 128], sizes = [1, 128], strides = [1, 1]} : vector<1x256xf32> to vector<1x128xf32>
    %38 = arith.subf %36, %37 : vector<1x128xf32>
    %39 = arith.mulf %38, %6 : vector<1x128xf32>
    %40 = arith.addf %39, %7 : vector<1x128xf32>
    %cst_15 = arith.constant 0.000000e+00 : f32
    %41 = vector.broadcast %cst_15 : f32 to vector<1x128xf32>
    %42 = arith.cmpf oge, %40, %41 : vector<1x128xf32>
    %cst_16 = arith.constant 2.000000e-01 : f32
    %43 = vector.broadcast %cst_16 : f32 to vector<1x128xf32>
    %44 = arith.mulf %43, %40 : vector<1x128xf32>
    %45 = arith.select %42, %40, %44 : vector<1x128xi1>, vector<1x128xf32>
    %c0_17 = arith.constant 0 : index
    %c0_18 = arith.constant 0 : index
    %46 = vector.load %arg5[%c0_17, %c0_18] : memref<128x384xf32, #tpu.memory_space<vmem>>, vector<128x384xf32>
    %cst_19 = arith.constant dense<0.000000e+00> : vector<1x384xf32>
    %47 = tpu.matmul %45, %46, %cst_19 {dimension_numbers = #tpu.dot_dimension_numbers<[1], [0], [0], [1], [0, 0, 1, 1], [], []>} : vector<1x128xf32>, vector<128x384xf32>, vector<1x384xf32> -> vector<1x384xf32>
    %48 = arith.addf %47, %8 : vector<1x384xf32>
    %c0_20 = arith.constant 0 : index
    %c0_21 = arith.constant 0 : index
    %49 = vector.load %arg4[%c0_20, %c0_21] : memref<8x384xf32, #tpu.memory_space<vmem>>, vector<8x384xf32>
    %c4 = arith.constant 4 : index
    %c0_22 = arith.constant 0 : index
    %50 = vector.load %arg2[%c4, %c0_22] : memref<10x384xf32, #tpu.memory_space<vmem>>, vector<1x384xf32>
    %c5 = arith.constant 5 : index
    %c0_23 = arith.constant 0 : index
    %51 = vector.load %arg2[%c5, %c0_23] : memref<10x384xf32, #tpu.memory_space<vmem>>, vector<1x384xf32>
    %c6 = arith.constant 6 : index
    %c0_24 = arith.constant 0 : index
    %52 = vector.load %arg2[%c6, %c0_24] : memref<10x384xf32, #tpu.memory_space<vmem>>, vector<1x384xf32>
    %53 = vector.broadcast %48 : vector<1x384xf32> to vector<8x384xf32>
    %54 = arith.mulf %49, %53 : vector<8x384xf32>
    %55 = vector.broadcast %48 : vector<1x384xf32> to vector<8x384xf32>
    %56 = arith.mulf %54, %55 : vector<8x384xf32>
    %57 = tpu.concatenate %54, %56 in 0 : vector<8x384xf32>, vector<8x384xf32> -> vector<16x384xf32>
    %cst_25 = arith.constant dense<0.000000e+00> : vector<16xf32>
    %58 = vector.multi_reduction <add>, %57, %cst_25 [1] : vector<16x384xf32> to vector<16xf32>
    %59 = vector.shape_cast %58 : vector<16xf32> to vector<16x1xf32>
    %cst_26 = arith.constant 0.0238095243 : f32
    %60 = vector.broadcast %cst_26 : f32 to vector<16x1xf32>
    %61 = arith.mulf %59, %60 : vector<16x1xf32>
    %62 = vector.extract_strided_slice %61 {offsets = [0, 0], sizes = [8, 1], strides = [1, 1]} : vector<16x1xf32> to vector<8x1xf32>
    %63 = vector.extract_strided_slice %61 {offsets = [8, 0], sizes = [8, 1], strides = [1, 1]} : vector<16x1xf32> to vector<8x1xf32>
    %64 = arith.mulf %62, %62 : vector<8x1xf32>
    %65 = arith.subf %63, %64 : vector<8x1xf32>
    %cst_27 = arith.constant 0.000000e+00 : f32
    %66 = vector.broadcast %cst_27 : f32 to vector<8x1xf32>
    %67 = arith.maximumf %65, %66 : vector<8x1xf32>
    %cst_28 = arith.constant 9.99999974E-6 : f32
    %68 = vector.broadcast %cst_28 : f32 to vector<8x1xf32>
    %69 = arith.addf %67, %68 : vector<8x1xf32>
    %70 = math.rsqrt %69 : vector<8x1xf32>
    %71 = vector.broadcast %70 : vector<8x1xf32> to vector<8x384xf32>
    %72 = arith.mulf %71, %49 : vector<8x384xf32>
    %73 = arith.mulf %62, %70 : vector<8x1xf32>
    %74 = vector.broadcast %73 : vector<8x1xf32> to vector<8x384xf32>
    %75 = arith.mulf %74, %49 : vector<8x384xf32>
    %76 = tpu.concatenate %72, %75 in 1 : vector<8x384xf32>, vector<8x384xf32> -> vector<8x768xf32>
    %cst_29 = arith.constant dense<0.000000e+00> : vector<768xf32>
    %77 = vector.multi_reduction <add>, %76, %cst_29 [0] : vector<8x768xf32> to vector<768xf32>
    %78 = vector.shape_cast %77 : vector<768xf32> to vector<1x768xf32>
    %79 = vector.extract_strided_slice %78 {offsets = [0, 0], sizes = [1, 384], strides = [1, 1]} : vector<1x768xf32> to vector<1x384xf32>
    %80 = arith.mulf %48, %79 : vector<1x384xf32>
    %81 = vector.extract_strided_slice %78 {offsets = [0, 384], sizes = [1, 384], strides = [1, 1]} : vector<1x768xf32> to vector<1x384xf32>
    %82 = arith.subf %80, %81 : vector<1x384xf32>
    %83 = arith.mulf %82, %50 : vector<1x384xf32>
    %84 = arith.addf %83, %51 : vector<1x384xf32>
    %cst_30 = arith.constant 0.000000e+00 : f32
    %85 = vector.broadcast %cst_30 : f32 to vector<1x384xf32>
    %86 = arith.cmpf oge, %84, %85 : vector<1x384xf32>
    %cst_31 = arith.constant 2.000000e-01 : f32
    %87 = vector.broadcast %cst_31 : f32 to vector<1x384xf32>
    %88 = arith.mulf %87, %84 : vector<1x384xf32>
    %89 = arith.select %86, %84, %88 : vector<1x384xi1>, vector<1x384xf32>
    %c0_32 = arith.constant 0 : index
    %c0_33 = arith.constant 0 : index
    %90 = vector.load %arg6[%c0_32, %c0_33] : memref<384x384xf32, #tpu.memory_space<vmem>>, vector<384x384xf32>
    %cst_34 = arith.constant dense<0.000000e+00> : vector<1x384xf32>
    %91 = tpu.matmul %89, %90, %cst_34 {dimension_numbers = #tpu.dot_dimension_numbers<[1], [0], [0], [1], [0, 0, 1, 1], [], []>} : vector<1x384xf32>, vector<384x384xf32>, vector<1x384xf32> -> vector<1x384xf32>
    %92 = arith.addf %91, %52 : vector<1x384xf32>
    %c0_35 = arith.constant 0 : index
    %c0_36 = arith.constant 0 : index
    %93 = vector.load %arg4[%c0_35, %c0_36] : memref<8x384xf32, #tpu.memory_space<vmem>>, vector<8x384xf32>
    %c7 = arith.constant 7 : index
    %c0_37 = arith.constant 0 : index
    %94 = vector.load %arg2[%c7, %c0_37] : memref<10x384xf32, #tpu.memory_space<vmem>>, vector<1x384xf32>
    %c8 = arith.constant 8 : index
    %c0_38 = arith.constant 0 : index
    %95 = vector.load %arg2[%c8, %c0_38] : memref<10x384xf32, #tpu.memory_space<vmem>>, vector<1x384xf32>
    %c9 = arith.constant 9 : index
    %c0_39 = arith.constant 0 : index
    %96 = vector.load %arg2[%c9, %c0_39] : memref<10x384xf32, #tpu.memory_space<vmem>>, vector<1x128xf32>
    %97 = vector.broadcast %92 : vector<1x384xf32> to vector<8x384xf32>
    %98 = arith.mulf %93, %97 : vector<8x384xf32>
    %99 = vector.broadcast %92 : vector<1x384xf32> to vector<8x384xf32>
    %100 = arith.mulf %98, %99 : vector<8x384xf32>
    %101 = tpu.concatenate %98, %100 in 0 : vector<8x384xf32>, vector<8x384xf32> -> vector<16x384xf32>
    %cst_40 = arith.constant dense<0.000000e+00> : vector<16xf32>
    %102 = vector.multi_reduction <add>, %101, %cst_40 [1] : vector<16x384xf32> to vector<16xf32>
    %103 = vector.shape_cast %102 : vector<16xf32> to vector<16x1xf32>
    %cst_41 = arith.constant 0.0238095243 : f32
    %104 = vector.broadcast %cst_41 : f32 to vector<16x1xf32>
    %105 = arith.mulf %103, %104 : vector<16x1xf32>
    %106 = vector.extract_strided_slice %105 {offsets = [0, 0], sizes = [8, 1], strides = [1, 1]} : vector<16x1xf32> to vector<8x1xf32>
    %107 = vector.extract_strided_slice %105 {offsets = [8, 0], sizes = [8, 1], strides = [1, 1]} : vector<16x1xf32> to vector<8x1xf32>
    %108 = arith.mulf %106, %106 : vector<8x1xf32>
    %109 = arith.subf %107, %108 : vector<8x1xf32>
    %cst_42 = arith.constant 0.000000e+00 : f32
    %110 = vector.broadcast %cst_42 : f32 to vector<8x1xf32>
    %111 = arith.maximumf %109, %110 : vector<8x1xf32>
    %cst_43 = arith.constant 9.99999974E-6 : f32
    %112 = vector.broadcast %cst_43 : f32 to vector<8x1xf32>
    %113 = arith.addf %111, %112 : vector<8x1xf32>
    %114 = math.rsqrt %113 : vector<8x1xf32>
    %115 = vector.broadcast %114 : vector<8x1xf32> to vector<8x384xf32>
    %116 = arith.mulf %115, %93 : vector<8x384xf32>
    %117 = arith.mulf %106, %114 : vector<8x1xf32>
    %118 = vector.broadcast %117 : vector<8x1xf32> to vector<8x384xf32>
    %119 = arith.mulf %118, %93 : vector<8x384xf32>
    %120 = tpu.concatenate %116, %119 in 1 : vector<8x384xf32>, vector<8x384xf32> -> vector<8x768xf32>
    %cst_44 = arith.constant dense<0.000000e+00> : vector<768xf32>
    %121 = vector.multi_reduction <add>, %120, %cst_44 [0] : vector<8x768xf32> to vector<768xf32>
    %122 = vector.shape_cast %121 : vector<768xf32> to vector<1x768xf32>
    %123 = vector.extract_strided_slice %122 {offsets = [0, 0], sizes = [1, 384], strides = [1, 1]} : vector<1x768xf32> to vector<1x384xf32>
    %124 = arith.mulf %92, %123 : vector<1x384xf32>
    %125 = vector.extract_strided_slice %122 {offsets = [0, 384], sizes = [1, 384], strides = [1, 1]} : vector<1x768xf32> to vector<1x384xf32>
    %126 = arith.subf %124, %125 : vector<1x384xf32>
    %127 = arith.mulf %126, %94 : vector<1x384xf32>
    %128 = arith.addf %127, %95 : vector<1x384xf32>
    %cst_45 = arith.constant 0.000000e+00 : f32
    %129 = vector.broadcast %cst_45 : f32 to vector<1x384xf32>
    %130 = arith.cmpf oge, %128, %129 : vector<1x384xf32>
    %cst_46 = arith.constant 2.000000e-01 : f32
    %131 = vector.broadcast %cst_46 : f32 to vector<1x384xf32>
    %132 = arith.mulf %131, %128 : vector<1x384xf32>
    %133 = arith.select %130, %128, %132 : vector<1x384xi1>, vector<1x384xf32>
    %c0_47 = arith.constant 0 : index
    %c0_48 = arith.constant 0 : index
    %134 = vector.load %arg7[%c0_47, %c0_48] : memref<384x128xf32, #tpu.memory_space<vmem>>, vector<384x128xf32>
    %cst_49 = arith.constant dense<0.000000e+00> : vector<1x128xf32>
    %135 = tpu.matmul %133, %134, %cst_49 {dimension_numbers = #tpu.dot_dimension_numbers<[1], [0], [0], [1], [0, 0, 1, 1], [], []>} : vector<1x384xf32>, vector<384x128xf32>, vector<1x128xf32> -> vector<1x128xf32>
    %136 = arith.addf %135, %96 : vector<1x128xf32>
    %c0_50 = arith.constant 0 : index
    %c0_51 = arith.constant 0 : index
    %137 = vector.load %arg8[%c0_50, %c0_51] : memref<1x128xf32, #tpu.memory_space<vmem>>, vector<1x128xf32>
    tpu.vector_store %arg8[%c0_50, %c0_51], %136 {strides = array<i32>} : memref<1x128xf32, #tpu.memory_space<vmem>>, vector<1x128xf32>,
    return
  }
}

</mosaic_0001>

<llo_original>
// kernel: gen_phi_forward.1
$region0: #{gen_phi_forward.1}
  #allocation0 [shape = 'u32[]', space=smem, size = 0x4, offset = 0x4, fixed_abs, tag = 'smem constant byte address 0x4 - core index']
  #allocation1 [shape = 'u32[144,128]{1,0:T(1,128)}', space=vmem, size = 0x12000, scoped, tag = 'internal scratch']
  %s0 = inlined_call_operand.hbm [shape: f32[1,8], index: 0, kind: input, shape index: {}]
  %s1 = inlined_call_operand.vmem [shape: f32[8,128], index: 1, kind: input, shape index: {}]
  %s2 = inlined_call_operand.hbm [shape: f32[10,384], index: 2, kind: input, shape index: {}]
  %s3 = inlined_call_operand.hbm [shape: f32[8,128], index: 3, kind: input, shape index: {}]
  %s4 = inlined_call_operand.hbm [shape: f32[8,384], index: 4, kind: input, shape index: {}]
  %s5 = inlined_call_operand.hbm [shape: f32[128,384], index: 5, kind: input, shape index: {}]
  %s6 = inlined_call_operand.hbm [shape: f32[384,384], index: 6, kind: input, shape index: {}]
  %s7 = inlined_call_operand.hbm [shape: f32[384,128], index: 7, kind: input, shape index: {}]
  %s8 = inlined_call_operand.vmem [shape: f32[1,128], index: 8, kind: output, shape index: {}]
  %s9 = sld [smem:[#allocation0]]
  $region70: #{gen_phi_forward.1} parent=0
    _
  %s11 = ssub.s32 1, %s9
  %s12 = scalar_select 0, %s11, %s9
  $region1: #{gen_phi_forward.1} parent=0
    #allocation2 [shape = 'u8[512]{0}', space=vmem, size = 0x400, scoped, tag = 'input window, operand 0, single buffered']
    #allocation3 [shape = 's32[1]{0}', space=sflag, size = 0x4, scoped, tag = 'scoped memory for gen_phi_forward.1']
    #allocation4 [shape = 'u8[24576]{0}', space=vmem, size = 0x6000, scoped, tag = 'input window, operand 2, single buffered']
    #allocation5 [shape = 's32[1]{0}', space=sflag, size = 0x4, scoped, tag = 'scoped memory for gen_phi_forward.1']
    #allocation6 [shape = 'u8[4096]{0}', space=vmem, size = 0x1000, scoped, tag = 'input window, operand 3, single buffered']
    #allocation7 [shape = 'u8[12288]{0}', space=vmem, size = 0x3000, scoped, tag = 'input window, operand 4, single buffered']
    #allocation8 [shape = 's32[1]{0}', space=sflag, size = 0x4, scoped, tag = 'scoped memory for gen_phi_forward.1']
    #allocation9 [shape = 'u8[196608]{0}', space=vmem, size = 0x30000, scoped, tag = 'input window, operand 5, single buffered']
    #allocation10 [shape = 'u8[589824]{0}', space=vmem, size = 0x90000, scoped, tag = 'input window, operand 6, single buffered']
    #allocation11 [shape = 's32[1]{0}', space=sflag, size = 0x4, scoped, tag = 'scoped memory for gen_phi_forward.1']
    #allocation12 [shape = 'u8[196608]{0}', space=vmem, size = 0x30000, scoped, tag = 'input window, operand 7, single buffered']
    %13 = vsyncpa [#allocation3], 0
    %14 = vsyncpa [#allocation5], 0
    %15 = vsyncpa [#allocation8], 0
    %16 = vsyncpa [#allocation11], 0
    // Predicated region
    $region2: #{gen_phi_forward.1} parent=1 // pred_check
      _
    $region3: #{gen_phi_forward.1} parent=1 // pred_check_branch
      %18 = sbr.rel (0) target = $region5
    $region4: #{gen_phi_forward.1} parent=1 // pred_region
      %s20 = ssub.s32 16, 16
      %21 = vsyncadd [#allocation3], %s20
      %s23 = sshll.u32 [#allocation2], 4
      %s24 = int_to_ptr.vmem [resolvable:$true] %s23
      %26 = dma.hbm_to_vmem [thread:$0]  %s0, 16, %s24, [#allocation3]
    $region5: #{gen_phi_forward.1} parent=1 // pred_fallthru
      _
    // Predicated region
    $region6: #{gen_phi_forward.1} parent=1 // pred_check
      _
    $region7: #{gen_phi_forward.1} parent=1 // pred_check_branch
      %28 = sbr.rel (0) target = $region9
    $region8: #{gen_phi_forward.1} parent=1 // pred_region
      _
    $region9: #{gen_phi_forward.1} parent=1 // pred_fallthru
      _
    // Predicated region
    $region10: #{gen_phi_forward.1} parent=1 // pred_check
      _
    $region11: #{gen_phi_forward.1} parent=1 // pred_check_branch
      %30 = sbr.rel (0) target = $region13
    $region12: #{gen_phi_forward.1} parent=1 // pred_region
      %s32 = ssub.s32 768, 768
      %33 = vsyncadd [#allocation5], %s32
      %s34 = sshll.u32 [#allocation4], 4
      %s35 = int_to_ptr.vmem [resolvable:$true] %s34
      %40 = dma.hbm_to_vmem [thread:$0]  %s2, 768, %s35, [#allocation5], 384, 384, 24
    $region13: #{gen_phi_forward.1} parent=1 // pred_fallthru
      _
    // Predicated region
    $region14: #{gen_phi_forward.1} parent=1 // pred_check
      _
    $region15: #{gen_phi_forward.1} parent=1 // pred_check_branch
      %42 = sbr.rel (0) target = $region17
    $region16: #{gen_phi_forward.1} parent=1 // pred_region
      %s44 = ssub.s32 128, 128
      %45 = vsyncadd [#allocation5], %s44
      %s47 = sshll.u32 [#allocation6], 4
      %s48 = int_to_ptr.vmem [resolvable:$true] %s47
      %50 = dma.hbm_to_vmem [thread:$0]  %s3, 128, %s48, [#allocation5]
    $region17: #{gen_phi_forward.1} parent=1 // pred_fallthru
      _
    // Predicated region
    $region18: #{gen_phi_forward.1} parent=1 // pred_check
      _
    $region19: #{gen_phi_forward.1} parent=1 // pred_check_branch
      %52 = sbr.rel (0) target = $region21
    $region20: #{gen_phi_forward.1} parent=1 // pred_region
      %s54 = ssub.s32 384, 384
      %55 = vsyncadd [#allocation8], %s54
      %s57 = sshll.u32 [#allocation7], 4
      %s58 = int_to_ptr.vmem [resolvable:$true] %s57
      %60 = dma.hbm_to_vmem [thread:$0]  %s4, 384, %s58, [#allocation8]
    $region21: #{gen_phi_forward.1} parent=1 // pred_fallthru
      _
    // Predicated region
    $region22: #{gen_phi_forward.1} parent=1 // pred_check
      _
    $region23: #{gen_phi_forward.1} parent=1 // pred_check_branch
      %62 = sbr.rel (0) target = $region25
    $region24: #{gen_phi_forward.1} parent=1 // pred_region
      %s64 = ssub.s32 6144, 6144
      %65 = vsyncadd [#allocation8], %s64
      %s66 = sshll.u32 [#allocation9], 4
      %s67 = int_to_ptr.vmem [resolvable:$true] %s66
      %72 = dma.hbm_to_vmem [thread:$0]  %s5, 6144, %s67, [#allocation8], 384, 384, 24
    $region25: #{gen_phi_forward.1} parent=1 // pred_fallthru
      _
    // Predicated region
    $region26: #{gen_phi_forward.1} parent=1 // pred_check
      _
    $region27: #{gen_phi_forward.1} parent=1 // pred_check_branch
      %74 = sbr.rel (0) target = $region29
    $region28: #{gen_phi_forward.1} parent=1 // pred_region
      %s76 = ssub.s32 18432, 18432
      %77 = vsyncadd [#allocation11], %s76
      %s78 = sshll.u32 [#allocation10], 4
      %s79 = int_to_ptr.vmem [resolvable:$true] %s78
      %84 = dma.hbm_to_vmem [thread:$0]  %s6, 18432, %s79, [#allocation11], 384, 384, 24
    $region29: #{gen_phi_forward.1} parent=1 // pred_fallthru
      _
    // Predicated region
    $region30: #{gen_phi_forward.1} parent=1 // pred_check
      _
    $region31: #{gen_phi_forward.1} parent=1 // pred_check_branch
      %86 = sbr.rel (0) target = $region33
    $region32: #{gen_phi_forward.1} parent=1 // pred_region
      %s88 = ssub.s32 6144, 6144
      %89 = vsyncadd [#allocation11], %s88
      %s90 = sshll.u32 [#allocation12], 4
      %s91 = int_to_ptr.vmem [resolvable:$true] %s90
      %96 = dma.hbm_to_vmem [thread:$0]  %s7, 6144, %s91, [#allocation11], 128, 128, 8
    $region33: #{gen_phi_forward.1} parent=1 // pred_fallthru
      _
    // Predicated region
    $region34: #{gen_phi_forward.1} parent=1 // pred_check
      _
    $region35: #{gen_phi_forward.1} parent=1 // pred_check_branch
      %98 = sbr.rel (0) target = $region37
    $region36: #{gen_phi_forward.1} parent=1 // pred_region
      %99 = dma.done [#allocation3], 16
    $region37: #{gen_phi_forward.1} parent=1 // pred_fallthru
      _
    // Predicated region
    $region38: #{gen_phi_forward.1} parent=1 // pred_check
      _
    $region39: #{gen_phi_forward.1} parent=1 // pred_check_branch
      %101 = sbr.rel (0) target = $region41
    $region40: #{gen_phi_forward.1} parent=1 // pred_region
      %102 = dma.done [#allocation5], 768
    $region41: #{gen_phi_forward.1} parent=1 // pred_fallthru
      _
    // Predicated region
    $region42: #{gen_phi_forward.1} parent=1 // pred_check
      _
    $region43: #{gen_phi_forward.1} parent=1 // pred_check_branch
      %104 = sbr.rel (0) target = $region45
    $region44: #{gen_phi_forward.1} parent=1 // pred_region
      %105 = dma.done [#allocation5], 128
    $region45: #{gen_phi_forward.1} parent=1 // pred_fallthru
      _
    // Predicated region
    $region46: #{gen_phi_forward.1} parent=1 // pred_check
      _
    $region47: #{gen_phi_forward.1} parent=1 // pred_check_branch
      %107 = sbr.rel (0) target = $region49
    $region48: #{gen_phi_forward.1} parent=1 // pred_region
      %108 = dma.done [#allocation8], 384
    $region49: #{gen_phi_forward.1} parent=1 // pred_fallthru
      _
    // Predicated region
    $region50: #{gen_phi_forward.1} parent=1 // pred_check
      _
    $region51: #{gen_phi_forward.1} parent=1 // pred_check_branch
      %110 = sbr.rel (0) target = $region53
    $region52: #{gen_phi_forward.1} parent=1 // pred_region
      %111 = dma.done [#allocation8], 6144
    $region53: #{gen_phi_forward.1} parent=1 // pred_fallthru
      _
    // Predicated region
    $region54: #{gen_phi_forward.1} parent=1 // pred_check
      _
    $region55: #{gen_phi_forward.1} parent=1 // pred_check_branch
      %113 = sbr.rel (0) target = $region57
    $region56: #{gen_phi_forward.1} parent=1 // pred_region
      %114 = dma.done [#allocation11], 18432
    $region57: #{gen_phi_forward.1} parent=1 // pred_fallthru
      _
    // Predicated region
    $region58: #{gen_phi_forward.1} parent=1 // pred_check
      _
    $region59: #{gen_phi_forward.1} parent=1 // pred_check_branch
      %116 = sbr.rel (0) target = $region61
    $region60: #{gen_phi_forward.1} parent=1 // pred_region
      %117 = dma.done [#allocation11], 6144
    $region61: #{gen_phi_forward.1} parent=1 // pred_fallthru
      _
    %v118 = vld [vmem:[#allocation2] sm:$0x1]
    %v119 = vld [vmem:[%s1] sm:$0xff]
    %v120 = vld [vmem:[#allocation4] ss:$0 sm:$0xff]
    %vm121 = vcmask 64512
    %v123 = vsel %vm121, %v118, 0
    %125 = vmatprep.subr.mxu0 0.0
    %126 = vmatpush1.msra.mxu0 %v119
    %127 = vmatprep.subr.mxu0 0.0
    %128 = vmatpush1.msra.mxu0 0.0
    %129 = vmatprep.subr.mxu0 0.0
    %130 = vmatpush1.msra.mxu0 0.0
    %131 = vmatprep.subr.mxu0 0.0
    %132 = vmatpush1.msra.mxu0 0.0
    %133 = vmatprep.subr.mxu0 0.0
    %134 = vmatpush1.msra.mxu0 0.0
    %135 = vmatprep.subr.mxu0 0.0
    %136 = vmatpush1.msra.mxu0 0.0
    %137 = vmatprep.subr.mxu0 0.0
    %138 = vmatpush1.msra.mxu0 0.0
    %139 = vmatprep.subr.mxu0 0.0
    %140 = vmatpush1.msra.mxu0 0.0
    %141 = vmatprep.subr.mxu0 0.0
    %142 = vmatpush1.msra.mxu0 0.0
    %143 = vmatprep.subr.mxu0 0.0
    %144 = vmatpush1.msra.mxu0 0.0
    %145 = vmatprep.subr.mxu0 0.0
    %146 = vmatpush1.msra.mxu0 0.0
    %147 = vmatprep.subr.mxu0 0.0
    %148 = vmatpush1.msra.mxu0 0.0
    %149 = vmatprep.subr.mxu0 0.0
    %150 = vmatpush1.msra.mxu0 0.0
    %151 = vmatprep.subr.mxu0 0.0
    %152 = vmatpush1.msra.mxu0 0.0
    %153 = vmatprep.subr.mxu0 0.0
    %154 = vmatpush1.msra.mxu0 0.0
    %155 = vmatprep.subr.mxu0 0.0
    %156 = vmatpush1.msra.mxu0 0.0
    %157 = vmatprep.subr.mxu0 0.0
    %158 = vmatpush1.msra.mxu0 0.0
    %159 = vmatprep.subr.mxu0 0.0
    %160 = vmatpush1.msra.mxu0 0.0
    %161 = vmatprep.subr.mxu0 0.0
    %162 = vmatpush1.msra.mxu0 0.0
    %163 = vmatprep.subr.mxu0 0.0
    %164 = vmatpush1.msra.mxu0 0.0
    %165 = vmatprep.subr.mxu0 0.0
    %166 = vmatpush1.msra.mxu0 0.0
    %167 = vmatprep.subr.mxu0 0.0
    %168 = vmatpush1.msra.mxu0 0.0
    %169 = vmatprep.subr.mxu0 0.0
    %170 = vmatpush1.msra.mxu0 0.0
    %171 = vmatprep.subr.mxu0 0.0
    %172 = vmatpush1.msra.mxu0 0.0
    %173 = vmatprep.subr.mxu0 0.0
    %174 = vmatpush1.msra.mxu0 0.0
    %175 = vmatprep.subr.mxu0 0.0
    %176 = vmatpush1.msra.mxu0 0.0
    %177 = vmatprep.subr.mxu0 0.0
    %178 = vmatpush1.msra.mxu0 0.0
    %179 = vmatprep.subr.mxu0 0.0
    %180 = vmatpush1.msra.mxu0 0.0
    %181 = vmatprep.subr.mxu0 0.0
    %182 = vmatpush1.msra.mxu0 0.0
    %183 = vmatprep.subr.mxu0 0.0
    %184 = vmatpush1.msra.mxu0 0.0
    %185 = vmatprep.subr.mxu0 0.0
    %186 = vmatpush1.msra.mxu0 0.0
    %187 = vmatprep.subr.mxu0 0.0
    %188 = vmatpush1.msra.mxu0 0.0
    %189 = vmatprep.mubr.f32.mxu0 0.0
    %190 = vmatmul.mubr.f32.gmra.mrb[0].mxu0 %v123
    %v191 = vpop.f32.mrb[0].mxu0
    %v192 = vadd.f32 %v120, %v191
    %v193 = vpop.f32.mrb[0].mxu0
    %194 = vdwg.mxu0
    %v195 = vld [vmem:[#allocation6] sm:$0xff]
    %v196 = vld [vmem:[#allocation4 + $0x1] ss:$0 sm:$0xff]
    %v197 = vld [vmem:[#allocation4 + $0x2] ss:$0 sm:$0xff]
    %s198 = scalar_lea.vmem [#allocation4], 3
    %v199 = vld [vmem:[%s198] ss:$8 sm:$0x7]
    %v200 = vlaneseq
    %v201 = vshrl.u32 %v200, 7
    %v202 = vsub.s32 0, %v201
    %v203 = vrot.slane %v192, %v202
    %v204 = vmul.f32 %v195, %v203
    %v205 = vmul.f32 %v204, %v203
    %206 = vadd.xlane.f32.xlu0 %v204
    %v207 = vpop.xlane.xlu0 %206
    %208 = vadd.xlane.f32.xlu0 %v205
    %v209 = vpop.xlane.xlu0 %208
    %v210 = vmul.f32 %v207, 0.023809524
    %v211 = vmul.f32 %v209, 0.023809524
    %v212 = vmul.f32 %v210, %v210
    %v213 = vsub.f32 %v211, %v212
    %v214 = vmax.f32 %v213, 0.0
    %v215 = vadd.f32 %v214, 1e-05
    %v216 = vrsqrt.pop %v215
    %v217 = vmul.f32 %v216, %v195
    %v218 = vmul.f32 %v210, %v216
    %v219 = vmul.f32 %v218, %v195
    %v220 = vrot.slane %v217, 4
    %v221 = vadd.f32 %v217, %v220
    %v222 = vrot.slane %v221, 2
    %v223 = vadd.f32 %v221, %v222
    %v224 = vrot.slane %v223, 1
    %v225 = vadd.f32 %v223, %v224
    %v226 = vrot.slane %v219, 4
    %v227 = vadd.f32 %v219, %v226
    %v228 = vrot.slane %v227, 2
    %v229 = vadd.f32 %v227, %v228
    %v230 = vrot.slane %v229, 1
    %v231 = vadd.f32 %v229, %v230
    %v232 = vmul.f32 %v192, %v225
    %v233 = vsub.f32 %v232, %v231
    %v234 = vmul.f32 %v233, %v196
    %v235 = vadd.f32 %v234, %v197
    %vm236 = vcmp.ge.f32.partialorder %v235, 0.0
    %v237 = vmul.f32 %v235, 0.2
    %v238 = vsel %vm236, %v235, %v237
    %v239 = vld [vmem:[#allocation9] sm:$0xff]
    %v240 = vld [vmem:[#allocation9 + $0x8] sm:$0xff]
    %v241 = vld [vmem:[#allocation9 + $0x10] sm:$0xff]
    %v242 = vld [vmem:[#allocation9 + $0x18] sm:$0xff]
    %v243 = vld [vmem:[#allocation9 + $0x20] sm:$0xff]
    %v244 = vld [vmem:[#allocation9 + $0x28] sm:$0xff]
    %v245 = vld [vmem:[#allocation9 + $0x30] sm:$0xff]
    %v246 = vld [vmem:[#allocation9 + $0x38] sm:$0xff]
    %v247 = vld [vmem:[#allocation9 + $0x40] sm:$0xff]
    %v248 = vld [vmem:[#allocation9 + $0x48] sm:$0xff]
    %v249 = vld [vmem:[#allocation9 + $0x50] sm:$0xff]
    %v250 = vld [vmem:[#allocation9 + $0x58] sm:$0xff]
    %v251 = vld [vmem:[#allocation9 + $0x60] sm:$0xff]
    %v252 = vld [vmem:[#allocation9 + $0x68] sm:$0xff]
    %v253 = vld [vmem:[#allocation9 + $0x70] sm:$0xff]
    %v254 = vld [vmem:[#allocation9 + $0x78] sm:$0xff]
    %v255 = vld [vmem:[#allocation9 + $0x80] sm:$0xff]
    %v256 = vld [vmem:[#allocation9 + $0x88] sm:$0xff]
    %v257 = vld [vmem:[#allocation9 + $0x90] sm:$0xff]
    %v258 = vld [vmem:[#allocation9 + $0x98] sm:$0xff]
    %v259 = vld [vmem:[#allocation9 + $0xa0] sm:$0xff]
    %v260 = vld [vmem:[#allocation9 + $0xa8] sm:$0xff]
    %v261 = vld [vmem:[#allocation9 + $0xb0] sm:$0xff]
    %v262 = vld [vmem:[#allocation9 + $0xb8] sm:$0xff]
    %v263 = vld [vmem:[#allocation9 + $0xc0] sm:$0xff]
    %v264 = vld [vmem:[#allocation9 + $0xc8] sm:$0xff]
    %v265 = vld [vmem:[#allocation9 + $0xd0] sm:$0xff]
    %v266 = vld [vmem:[#allocation9 + $0xd8] sm:$0xff]
    %v267 = vld [vmem:[#allocation9 + $0xe0] sm:$0xff]
    %v268 = vld [vmem:[#allocation9 + $0xe8] sm:$0xff]
    %v269 = vld [vmem:[#allocation9 + $0xf0] sm:$0xff]
    %v270 = vld [vmem:[#allocation9 + $0xf8] sm:$0xff]
    %v271 = vld [vmem:[#allocation9 + $0x100] sm:$0xff]
    %v272 = vld [vmem:[#allocation9 + $0x108] sm:$0xff]
    %v273 = vld [vmem:[#allocation9 + $0x110] sm:$0xff]
    %v274 = vld [vmem:[#allocation9 + $0x118] sm:$0xff]
    %v275 = vld [vmem:[#allocation9 + $0x120] sm:$0xff]
    %v276 = vld [vmem:[#allocation9 + $0x128] sm:$0xff]
    %v277 = vld [vmem:[#allocation9 + $0x130] sm:$0xff]
    %v278 = vld [vmem:[#allocation9 + $0x138] sm:$0xff]
    %v279 = vld [vmem:[#allocation9 + $0x140] sm:$0xff]
    %v280 = vld [vmem:[#allocation9 + $0x148] sm:$0xff]
    %v281 = vld [vmem:[#allocation9 + $0x150] sm:$0xff]
    %v282 = vld [vmem:[#allocation9 + $0x158] sm:$0xff]
    %v283 = vld [vmem:[#allocation9 + $0x160] sm:$0xff]
    %v284 = vld [vmem:[#allocation9 + $0x168] sm:$0xff]
    %v285 = vld [vmem:[#allocation9 + $0x170] sm:$0xff]
    %v286 = vld [vmem:[#allocation9 + $0x178] sm:$0xff]
    %v288 = vlaneseq
    %v289 = vshrl.u32 %v288, 7
    %v290 = vsub.s32 0, %v289
    %v291 = vrot.slane %v199, %v290
    %v292 = vlaneseq
    %v293 = vshrl.u32 %v292, 7
    %v294 = vsub.s32 1, %v293
    %v295 = vrot.slane %v199, %v294
    %v296 = vlaneseq
    %v297 = vshrl.u32 %v296, 7
    %v298 = vsub.s32 2, %v297
    %v299 = vrot.slane %v199, %v298
    %303 = vmatprep.subr.mxu0 %v240
    %304 = vmatpush1.msra.mxu0 %v239
    %305 = vmatprep.subr.mxu0 %v243
    %306 = vmatpush1.msra.mxu0 %v242
    %307 = vmatprep.subr.mxu0 %v246
    %308 = vmatpush1.msra.mxu0 %v245
    %309 = vmatprep.subr.mxu0 %v249
    %310 = vmatpush1.msra.mxu0 %v248
    %311 = vmatprep.subr.mxu0 %v252
    %312 = vmatpush1.msra.mxu0 %v251
    %313 = vmatprep.subr.mxu0 %v255
    %314 = vmatpush1.msra.mxu0 %v254
    %315 = vmatprep.subr.mxu0 %v258
    %316 = vmatpush1.msra.mxu0 %v257
    %317 = vmatprep.subr.mxu0 %v261
    %318 = vmatpush1.msra.mxu0 %v260
    %319 = vmatprep.subr.mxu0 %v264
    %320 = vmatpush1.msra.mxu0 %v263
    %321 = vmatprep.subr.mxu0 %v267
    %322 = vmatpush1.msra.mxu0 %v266
    %323 = vmatprep.subr.mxu0 %v270
    %324 = vmatpush1.msra.mxu0 %v269
    %325 = vmatprep.subr.mxu0 %v273
    %326 = vmatpush1.msra.mxu0 %v272
    %327 = vmatprep.subr.mxu0 %v276
    %328 = vmatpush1.msra.mxu0 %v275
    %329 = vmatprep.subr.mxu0 %v279
    %330 = vmatpush1.msra.mxu0 %v278
    %331 = vmatprep.subr.mxu0 %v282
    %332 = vmatpush1.msra.mxu0 %v281
    %333 = vmatprep.subr.mxu0 %v285
    %334 = vmatpush1.msra.mxu0 %v284
    %335 = vmatprep.subr.mxu0 0.0
    %336 = vmatpush1.msra.mxu0 0.0
    %337 = vmatprep.subr.mxu0 0.0
    %338 = vmatpush1.msra.mxu0 0.0
    %339 = vmatprep.subr.mxu0 0.0
    %340 = vmatpush1.msra.mxu0 0.0
    %341 = vmatprep.subr.mxu0 0.0
    %342 = vmatpush1.msra.mxu0 0.0
    %343 = vmatprep.subr.mxu0 0.0
    %344 = vmatpush1.msra.mxu0 0.0
    %345 = vmatprep.subr.mxu0 0.0
    %346 = vmatpush1.msra.mxu0 0.0
    %347 = vmatprep.subr.mxu0 0.0
    %348 = vmatpush1.msra.mxu0 0.0
    %349 = vmatprep.subr.mxu0 0.0
    %350 = vmatpush1.msra.mxu0 0.0
    %351 = vmatprep.subr.mxu0 0.0
    %352 = vmatpush1.msra.mxu0 0.0
    %353 = vmatprep.subr.mxu0 0.0
    %354 = vmatpush1.msra.mxu0 0.0
    %355 = vmatprep.subr.mxu0 0.0
    %356 = vmatpush1.msra.mxu0 0.0
    %357 = vmatprep.subr.mxu0 0.0
    %358 = vmatpush1.msra.mxu0 0.0
    %359 = vmatprep.subr.mxu0 0.0
    %360 = vmatpush1.msra.mxu0 0.0
    %361 = vmatprep.subr.mxu0 0.0
    %362 = vmatpush1.msra.mxu0 0.0
    %363 = vmatprep.subr.mxu0 0.0
    %364 = vmatpush1.msra.mxu0 0.0
    %365 = vmatprep.subr.mxu0 0.0
    %366 = vmatpush1.msra.mxu0 0.0
    %367 = vmatprep.mubr.f32.mxu0 0.0
    %368 = vmatmul.mubr.f32.gmra.mrb[0].mxu0 %v238
    %v369 = vpop.f32.mrb[0].mxu0
    %v370 = vadd.f32 %v291, %v369
    %v371 = vpop.f32.mrb[0].mxu0
    %v372 = vadd.f32 %v295, %v371
    %373 = vdwg.mxu0
    %374 = vmatprep.subr.mxu0 0.0
    %375 = vmatpush1.msra.mxu0 %v241
    %376 = vmatprep.subr.mxu0 0.0
    %377 = vmatpush1.msra.mxu0 %v244
    %378 = vmatprep.subr.mxu0 0.0
    %379 = vmatpush1.msra.mxu0 %v247
    %380 = vmatprep.subr.mxu0 0.0
    %381 = vmatpush1.msra.mxu0 %v250
    %382 = vmatprep.subr.mxu0 0.0
    %383 = vmatpush1.msra.mxu0 %v253
    %384 = vmatprep.subr.mxu0 0.0
    %385 = vmatpush1.msra.mxu0 %v256
    %386 = vmatprep.subr.mxu0 0.0
    %387 = vmatpush1.msra.mxu0 %v259
    %388 = vmatprep.subr.mxu0 0.0
    %389 = vmatpush1.msra.mxu0 %v262
    %390 = vmatprep.subr.mxu0 0.0
    %391 = vmatpush1.msra.mxu0 %v265
    %392 = vmatprep.subr.mxu0 0.0
    %393 = vmatpush1.msra.mxu0 %v268
    %394 = vmatprep.subr.mxu0 0.0
    %395 = vmatpush1.msra.mxu0 %v271
    %396 = vmatprep.subr.mxu0 0.0
    %397 = vmatpush1.msra.mxu0 %v274
    %398 = vmatprep.subr.mxu0 0.0
    %399 = vmatpush1.msra.mxu0 %v277
    %400 = vmatprep.subr.mxu0 0.0
    %401 = vmatpush1.msra.mxu0 %v280
    %402 = vmatprep.subr.mxu0 0.0
    %403 = vmatpush1.msra.mxu0 %v283
    %404 = vmatprep.subr.mxu0 0.0
    %405 = vmatpush1.msra.mxu0 %v286
    %406 = vmatprep.subr.mxu0 0.0
    %407 = vmatpush1.msra.mxu0 0.0
    %408 = vmatprep.subr.mxu0 0.0
    %409 = vmatpush1.msra.mxu0 0.0
    %410 = vmatprep.subr.mxu0 0.0
    %411 = vmatpush1.msra.mxu0 0.0
    %412 = vmatprep.subr.mxu0 0.0
    %413 = vmatpush1.msra.mxu0 0.0
    %414 = vmatprep.subr.mxu0 0.0
    %415 = vmatpush1.msra.mxu0 0.0
    %416 = vmatprep.subr.mxu0 0.0
    %417 = vmatpush1.msra.mxu0 0.0
    %418 = vmatprep.subr.mxu0 0.0
    %419 = vmatpush1.msra.mxu0 0.0
    %420 = vmatprep.subr.mxu0 0.0
    %421 = vmatpush1.msra.mxu0 0.0
    %422 = vmatprep.subr.mxu0 0.0
    %423 = vmatpush1.msra.mxu0 0.0
    %424 = vmatprep.subr.mxu0 0.0
    %425 = vmatpush1.msra.mxu0 0.0
    %426 = vmatprep.subr.mxu0 0.0
    %427 = vmatpush1.msra.mxu0 0.0
    %428 = vmatprep.subr.mxu0 0.0
    %429 = vmatpush1.msra.mxu0 0.0
    %430 = vmatprep.subr.mxu0 0.0
    %431 = vmatpush1.msra.mxu0 0.0
    %432 = vmatprep.subr.mxu0 0.0
    %433 = vmatpush1.msra.mxu0 0.0
    %434 = vmatprep.subr.mxu0 0.0
    %435 = vmatpush1.msra.mxu0 0.0
    %436 = vmatprep.subr.mxu0 0.0
    %437 = vmatpush1.msra.mxu0 0.0
    %438 = vmatprep.mubr.f32.mxu0 0.0
    %439 = vmatmul.mubr.f32.gmra.mrb[0].mxu0 %v238
    %v440 = vpop.f32.mrb[0].mxu0
    %v441 = vadd.f32 %v299, %v440
    %v442 = vpop.f32.mrb[0].mxu0
    %443 = vdwg.mxu0
    %v444 = vld [vmem:[#allocation7] sm:$0xff]
    %v445 = vld [vmem:[#allocation7 + $0x8] sm:$0xff]
    %v446 = vld [vmem:[#allocation7 + $0x10] sm:$0xff]
    %s447 = scalar_lea.vmem [#allocation4], 4
    %v448 = vld [vmem:[%s447] ss:$8 sm:$0x7]
    %s449 = scalar_lea.vmem [#allocation4], 5
    %v450 = vld [vmem:[%s449] ss:$8 sm:$0x7]
    %s451 = scalar_lea.vmem [#allocation4], 6
    %v452 = vld [vmem:[%s451] ss:$8 sm:$0x7]
    %v453 = vlaneseq
    %v454 = vshrl.u32 %v453, 7
    %v455 = vsub.s32 0, %v454
    %v456 = vrot.slane %v370, %v455
    %v457 = vlaneseq
    %v458 = vshrl.u32 %v457, 7
    %v459 = vsub.s32 0, %v458
    %v460 = vrot.slane %v372, %v459
    %v461 = vlaneseq
    %v462 = vshrl.u32 %v461, 7
    %v463 = vsub.s32 0, %v462
    %v464 = vrot.slane %v441, %v463
    %v465 = vmul.f32 %v444, %v456
    %v466 = vmul.f32 %v445, %v460
    %v467 = vmul.f32 %v446, %v464
    %v468 = vmul.f32 %v465, %v456
    %v469 = vmul.f32 %v466, %v460
    %v470 = vmul.f32 %v467, %v464
    %v471 = vadd.f32 %v465, %v466
    %v472 = vadd.f32 %v471, %v467
    %473 = vadd.xlane.f32.xlu0 %v472
    %v474 = vpop.xlane.xlu0 %473
    %v475 = vadd.f32 %v468, %v469
    %v476 = vadd.f32 %v475, %v470
    %477 = vadd.xlane.f32.xlu0 %v476
    %v478 = vpop.xlane.xlu0 %477
    %v479 = vmul.f32 %v474, 0.023809524
    %v480 = vmul.f32 %v478, 0.023809524
    %v481 = vmul.f32 %v479, %v479
    %v482 = vsub.f32 %v480, %v481
    %v483 = vmax.f32 %v482, 0.0
    %v484 = vadd.f32 %v483, 1e-05
    %v485 = vrsqrt.pop %v484
    %v486 = vmul.f32 %v485, %v444
    %v487 = vmul.f32 %v485, %v445
    %v488 = vmul.f32 %v485, %v446
    %v489 = vmul.f32 %v479, %v485
    %v490 = vmul.f32 %v489, %v444
    %v491 = vmul.f32 %v489, %v445
    %v492 = vmul.f32 %v489, %v446
    %v493 = vrot.slane %v486, 4
    %v494 = vadd.f32 %v486, %v493
    %v495 = vrot.slane %v494, 2
    %v496 = vadd.f32 %v494, %v495
    %v497 = vrot.slane %v496, 1
    %v498 = vadd.f32 %v496, %v497
    %v499 = vrot.slane %v487, 4
    %v500 = vadd.f32 %v487, %v499
    %v501 = vrot.slane %v500, 2
    %v502 = vadd.f32 %v500, %v501
    %v503 = vrot.slane %v502, 1
    %v504 = vadd.f32 %v502, %v503
    %v505 = vrot.slane %v488, 4
    %v506 = vadd.f32 %v488, %v505
    %v507 = vrot.slane %v506, 2
    %v508 = vadd.f32 %v506, %v507
    %v509 = vrot.slane %v508, 1
    %v510 = vadd.f32 %v508, %v509
    %v511 = vrot.slane %v490, 4
    %v512 = vadd.f32 %v490, %v511
    %v513 = vrot.slane %v512, 2
    %v514 = vadd.f32 %v512, %v513
    %v515 = vrot.slane %v514, 1
    %v516 = vadd.f32 %v514, %v515
    %v517 = vrot.slane %v491, 4
    %v518 = vadd.f32 %v491, %v517
    %v519 = vrot.slane %v518, 2
    %v520 = vadd.f32 %v518, %v519
    %v521 = vrot.slane %v520, 1
    %v522 = vadd.f32 %v520, %v521
    %v523 = vrot.slane %v492, 4
    %v524 = vadd.f32 %v492, %v523
    %v525 = vrot.slane %v524, 2
    %v526 = vadd.f32 %v524, %v525
    %v527 = vrot.slane %v526, 1
    %v528 = vadd.f32 %v526, %v527
    %v529 = vmul.f32 %v370, %v498
    %v530 = vmul.f32 %v372, %v504
    %v531 = vmul.f32 %v441, %v510
    %v532 = vsub.f32 %v529, %v516
    %v533 = vsub.f32 %v530, %v522
    %v534 = vsub.f32 %v531, %v528
    %v536 = vlaneseq
    %v537 = vshrl.u32 %v536, 7
    %v538 = vsub.s32 0, %v537
    %v539 = vrot.slane %v448, %v538
    %v540 = vlaneseq
    %v541 = vshrl.u32 %v540, 7
    %v542 = vsub.s32 1, %v541
    %v543 = vrot.slane %v448, %v542
    %v544 = vlaneseq
    %v545 = vshrl.u32 %v544, 7
    %v546 = vsub.s32 2, %v545
    %v547 = vrot.slane %v448, %v546
    %v551 = vmul.f32 %v532, %v539
    %v552 = vmul.f32 %v533, %v543
    %v553 = vmul.f32 %v534, %v547
    %v555 = vlaneseq
    %v556 = vshrl.u32 %v555, 7
    %v557 = vsub.s32 0, %v556
    %v558 = vrot.slane %v450, %v557
    %v559 = vlaneseq
    %v560 = vshrl.u32 %v559, 7
    %v561 = vsub.s32 1, %v560
    %v562 = vrot.slane %v450, %v561
    %v563 = vlaneseq
    %v564 = vshrl.u32 %v563, 7
    %v565 = vsub.s32 2, %v564
    %v566 = vrot.slane %v450, %v565
    %v570 = vadd.f32 %v551, %v558
    %v571 = vadd.f32 %v552, %v562
    %v572 = vadd.f32 %v553, %v566
    %vm573 = vcmp.ge.f32.partialorder %v570, 0.0
    %vm574 = vcmp.ge.f32.partialorder %v571, 0.0
    %vm575 = vcmp.ge.f32.partialorder %v572, 0.0
    %v576 = vmul.f32 %v570, 0.2
    %v577 = vmul.f32 %v571, 0.2
    %v578 = vmul.f32 %v572, 0.2
    %v579 = vsel %vm573, %v570, %v576
    %v580 = vsel %vm574, %v571, %v577
    %v581 = vsel %vm575, %v572, %v578
    %v582 = vld [vmem:[#allocation10] sm:$0xff]
    %v583 = vld [vmem:[#allocation10 + $0x8] sm:$0xff]
    %v584 = vld [vmem:[#allocation10 + $0x10] sm:$0xff]
    %v585 = vld [vmem:[#allocation10 + $0x18] sm:$0xff]
    %v586 = vld [vmem:[#allocation10 + $0x20] sm:$0xff]
    %v587 = vld [vmem:[#allocation10 + $0x28] sm:$0xff]
    %v588 = vld [vmem:[#allocation10 + $0x30] sm:$0xff]
    %v589 = vld [vmem:[#allocation10 + $0x38] sm:$0xff]
    %v590 = vld [vmem:[#allocation10 + $0x40] sm:$0xff]
    %v591 = vld [vmem:[#allocation10 + $0x48] sm:$0xff]
    %v592 = vld [vmem:[#allocation10 + $0x50] sm:$0xff]
    %v593 = vld [vmem:[#allocation10 + $0x58] sm:$0xff]
    %v594 = vld [vmem:[#allocation10 + $0x60] sm:$0xff]
    %v595 = vld [vmem:[#allocation10 + $0x68] sm:$0xff]
    %v596 = vld [vmem:[#allocation10 + $0x70] sm:$0xff]
    %v597 = vld [vmem:[#allocation10 + $0x78] sm:$0xff]
    %v598 = vld [vmem:[#allocation10 + $0x80] sm:$0xff]
    %v599 = vld [vmem:[#allocation10 + $0x88] sm:$0xff]
    %v600 = vld [vmem:[#allocation10 + $0x90] sm:$0xff]
    %v601 = vld [vmem:[#allocation10 + $0x98] sm:$0xff]
    %v602 = vld [vmem:[#allocation10 + $0xa0] sm:$0xff]
    %v603 = vld [vmem:[#allocation10 + $0xa8] sm:$0xff]
    %v604 = vld [vmem:[#allocation10 + $0xb0] sm:$0xff]
    %v605 = vld [vmem:[#allocation10 + $0xb8] sm:$0xff]
    %v606 = vld [vmem:[#allocation10 + $0xc0] sm:$0xff]
    %v607 = vld [vmem:[#allocation10 + $0xc8] sm:$0xff]
    %v608 = vld [vmem:[#allocation10 + $0xd0] sm:$0xff]
    %v609 = vld [vmem:[#allocation10 + $0xd8] sm:$0xff]
    %v610 = vld [vmem:[#allocation10 + $0xe0] sm:$0xff]
    %v611 = vld [vmem:[#allocation10 + $0xe8] sm:$0xff]
    %v612 = vld [vmem:[#allocation10 + $0xf0] sm:$0xff]
    %v613 = vld [vmem:[#allocation10 + $0xf8] sm:$0xff]
    %v614 = vld [vmem:[#allocation10 + $0x100] sm:$0xff]
    %v615 = vld [vmem:[#allocation10 + $0x108] sm:$0xff]
    %v616 = vld [vmem:[#allocation10 + $0x110] sm:$0xff]
    %v617 = vld [vmem:[#allocation10 + $0x118] sm:$0xff]
    %v618 = vld [vmem:[#allocation10 + $0x120] sm:$0xff]
    %v619 = vld [vmem:[#allocation10 + $0x128] sm:$0xff]
    %v620 = vld [vmem:[#allocation10 + $0x130] sm:$0xff]
    %v621 = vld [vmem:[#allocation10 + $0x138] sm:$0xff]
    %v622 = vld [vmem:[#allocation10 + $0x140] sm:$0xff]
    %v623 = vld [vmem:[#allocation10 + $0x148] sm:$0xff]
    %v624 = vld [vmem:[#allocation10 + $0x150] sm:$0xff]
    %v625 = vld [vmem:[#allocation10 + $0x158] sm:$0xff]
    %v626 = vld [vmem:[#allocation10 + $0x160] sm:$0xff]
    %v627 = vld [vmem:[#allocation10 + $0x168] sm:$0xff]
    %v628 = vld [vmem:[#allocation10 + $0x170] sm:$0xff]
    %v629 = vld [vmem:[#allocation10 + $0x178] sm:$0xff]
    %v630 = vld [vmem:[#allocation10 + $0x180] sm:$0xff]
    %v631 = vld [vmem:[#allocation10 + $0x188] sm:$0xff]
    %v632 = vld [vmem:[#allocation10 + $0x190] sm:$0xff]
    %v633 = vld [vmem:[#allocation10 + $0x198] sm:$0xff]
    %v634 = vld [vmem:[#allocation10 + $0x1a0] sm:$0xff]
    %v635 = vld [vmem:[#allocation10 + $0x1a8] sm:$0xff]
    %v636 = vld [vmem:[#allocation10 + $0x1b0] sm:$0xff]
    %v637 = vld [vmem:[#allocation10 + $0x1b8] sm:$0xff]
    %v638 = vld [vmem:[#allocation10 + $0x1c0] sm:$0xff]
    %v639 = vld [vmem:[#allocation10 + $0x1c8] sm:$0xff]
    %v640 = vld [vmem:[#allocation10 + $0x1d0] sm:$0xff]
    %v641 = vld [vmem:[#allocation10 + $0x1d8] sm:$0xff]
    %v642 = vld [vmem:[#allocation10 + $0x1e0] sm:$0xff]
    %v643 = vld [vmem:[#allocation10 + $0x1e8] sm:$0xff]
    %v644 = vld [vmem:[#allocation10 + $0x1f0] sm:$0xff]
    %v645 = vld [vmem:[#allocation10 + $0x1f8] sm:$0xff]
    %v646 = vld [vmem:[#allocation10 + $0x200] sm:$0xff]
    %v647 = vld [vmem:[#allocation10 + $0x208] sm:$0xff]
    %v648 = vld [vmem:[#allocation10 + $0x210] sm:$0xff]
    %v649 = vld [vmem:[#allocation10 + $0x218] sm:$0xff]
    %v650 = vld [vmem:[#allocation10 + $0x220] sm:$0xff]
    %v651 = vld [vmem:[#allocation10 + $0x228] sm:$0xff]
    %v652 = vld [vmem:[#allocation10 + $0x230] sm:$0xff]
    %v653 = vld [vmem:[#allocation10 + $0x238] sm:$0xff]
    %v654 = vld [vmem:[#allocation10 + $0x240] sm:$0xff]
    %v655 = vld [vmem:[#allocation10 + $0x248] sm:$0xff]
    %v656 = vld [vmem:[#allocation10 + $0x250] sm:$0xff]
    %v657 = vld [vmem:[#allocation10 + $0x258] sm:$0xff]
    %v658 = vld [vmem:[#allocation10 + $0x260] sm:$0xff]
    %v659 = vld [vmem:[#allocation10 + $0x268] sm:$0xff]
    %v660 = vld [vmem:[#allocation10 + $0x270] sm:$0xff]
    %v661 = vld [vmem:[#allocation10 + $0x278] sm:$0xff]
    %v662 = vld [vmem:[#allocation10 + $0x280] sm:$0xff]
    %v663 = vld [vmem:[#allocation10 + $0x288] sm:$0xff]
    %v664 = vld [vmem:[#allocation10 + $0x290] sm:$0xff]
    %v665 = vld [vmem:[#allocation10 + $0x298] sm:$0xff]
    %v666 = vld [vmem:[#allocation10 + $0x2a0] sm:$0xff]
    %v667 = vld [vmem:[#allocation10 + $0x2a8] sm:$0xff]
    %v668 = vld [vmem:[#allocation10 + $0x2b0] sm:$0xff]
    %v669 = vld [vmem:[#allocation10 + $0x2b8] sm:$0xff]
    %v670 = vld [vmem:[#allocation10 + $0x2c0] sm:$0xff]
    %v671 = vld [vmem:[#allocation10 + $0x2c8] sm:$0xff]
    %v672 = vld [vmem:[#allocation10 + $0x2d0] sm:$0xff]
    %v673 = vld [vmem:[#allocation10 + $0x2d8] sm:$0xff]
    %v674 = vld [vmem:[#allocation10 + $0x2e0] sm:$0xff]
    %v675 = vld [vmem:[#allocation10 + $0x2e8] sm:$0xff]
    %v676 = vld [vmem:[#allocation10 + $0x2f0] sm:$0xff]
    %v677 = vld [vmem:[#allocation10 + $0x2f8] sm:$0xff]
    %v678 = vld [vmem:[#allocation10 + $0x300] sm:$0xff]
    %v679 = vld [vmem:[#allocation10 + $0x308] sm:$0xff]
    %v680 = vld [vmem:[#allocation10 + $0x310] sm:$0xff]
    %v681 = vld [vmem:[#allocation10 + $0x318] sm:$0xff]
    %v682 = vld [vmem:[#allocation10 + $0x320] sm:$0xff]
    %v683 = vld [vmem:[#allocation10 + $0x328] sm:$0xff]
    %v684 = vld [vmem:[#allocation10 + $0x330] sm:$0xff]
    %v685 = vld [vmem:[#allocation10 + $0x338] sm:$0xff]
    %v686 = vld [vmem:[#allocation10 + $0x340] sm:$0xff]
    %v687 = vld [vmem:[#allocation10 + $0x348] sm:$0xff]
    %v688 = vld [vmem:[#allocation10 + $0x350] sm:$0xff]
    %v689 = vld [vmem:[#allocation10 + $0x358] sm:$0xff]
    %v690 = vld [vmem:[#allocation10 + $0x360] sm:$0xff]
    %v691 = vld [vmem:[#allocation10 + $0x368] sm:$0xff]
    %v692 = vld [vmem:[#allocation10 + $0x370] sm:$0xff]
    %v693 = vld [vmem:[#allocation10 + $0x378] sm:$0xff]
    %v694 = vld [vmem:[#allocation10 + $0x380] sm:$0xff]
    %v695 = vld [vmem:[#allocation10 + $0x388] sm:$0xff]
    %v696 = vld [vmem:[#allocation10 + $0x390] sm:$0xff]
    %v697 = vld [vmem:[#allocation10 + $0x398] sm:$0xff]
    %v698 = vld [vmem:[#allocation10 + $0x3a0] sm:$0xff]
    %v699 = vld [vmem:[#allocation10 + $0x3a8] sm:$0xff]
    %v700 = vld [vmem:[#allocation10 + $0x3b0] sm:$0xff]
    %v701 = vld [vmem:[#allocation10 + $0x3b8] sm:$0xff]
    %v702 = vld [vmem:[#allocation10 + $0x3c0] sm:$0xff]
    %v703 = vld [vmem:[#allocation10 + $0x3c8] sm:$0xff]
    %v704 = vld [vmem:[#allocation10 + $0x3d0] sm:$0xff]
    %v705 = vld [vmem:[#allocation10 + $0x3d8] sm:$0xff]
    %v706 = vld [vmem:[#allocation10 + $0x3e0] sm:$0xff]
    %v707 = vld [vmem:[#allocation10 + $0x3e8] sm:$0xff]
    %v708 = vld [vmem:[#allocation10 + $0x3f0] sm:$0xff]
    %v709 = vld [vmem:[#allocation10 + $0x3f8] sm:$0xff]
    %v710 = vld [vmem:[#allocation10 + $0x400] sm:$0xff]
    %v711 = vld [vmem:[#allocation10 + $0x408] sm:$0xff]
    %v712 = vld [vmem:[#allocation10 + $0x410] sm:$0xff]
    %v713 = vld [vmem:[#allocation10 + $0x418] sm:$0xff]
    %v714 = vld [vmem:[#allocation10 + $0x420] sm:$0xff]
    %v715 = vld [vmem:[#allocation10 + $0x428] sm:$0xff]
    %v716 = vld [vmem:[#allocation10 + $0x430] sm:$0xff]
    %v717 = vld [vmem:[#allocation10 + $0x438] sm:$0xff]
    %v718 = vld [vmem:[#allocation10 + $0x440] sm:$0xff]
    %v719 = vld [vmem:[#allocation10 + $0x448] sm:$0xff]
    %v720 = vld [vmem:[#allocation10 + $0x450] sm:$0xff]
    %v721 = vld [vmem:[#allocation10 + $0x458] sm:$0xff]
    %v722 = vld [vmem:[#allocation10 + $0x460] sm:$0xff]
    %v723 = vld [vmem:[#allocation10 + $0x468] sm:$0xff]
    %v724 = vld [vmem:[#allocation10 + $0x470] sm:$0xff]
    %v725 = vld [vmem:[#allocation10 + $0x478] sm:$0xff]
    %v727 = vlaneseq
    %v728 = vshrl.u32 %v727, 7
    %v729 = vsub.s32 0, %v728
    %v730 = vrot.slane %v452, %v729
    %v731 = vlaneseq
    %v732 = vshrl.u32 %v731, 7
    %v733 = vsub.s32 1, %v732
    %v734 = vrot.slane %v452, %v733
    %v735 = vlaneseq
    %v736 = vshrl.u32 %v735, 7
    %v737 = vsub.s32 2, %v736
    %v738 = vrot.slane %v452, %v737
    %742 = vmatprep.subr.mxu0 %v583
    %743 = vmatpush1.msra.mxu0 %v582
    %744 = vmatprep.subr.mxu0 %v586
    %745 = vmatpush1.msra.mxu0 %v585
    %746 = vmatprep.subr.mxu0 %v589
    %747 = vmatpush1.msra.mxu0 %v588
    %748 = vmatprep.subr.mxu0 %v592
    %749 = vmatpush1.msra.mxu0 %v591
    %750 = vmatprep.subr.mxu0 %v595
    %751 = vmatpush1.msra.mxu0 %v594
    %752 = vmatprep.subr.mxu0 %v598
    %753 = vmatpush1.msra.mxu0 %v597
    %754 = vmatprep.subr.mxu0 %v601
    %755 = vmatpush1.msra.mxu0 %v600
    %756 = vmatprep.subr.mxu0 %v604
    %757 = vmatpush1.msra.mxu0 %v603
    %758 = vmatprep.subr.mxu0 %v607
    %759 = vmatpush1.msra.mxu0 %v606
    %760 = vmatprep.subr.mxu0 %v610
    %761 = vmatpush1.msra.mxu0 %v609
    %762 = vmatprep.subr.mxu0 %v613
    %763 = vmatpush1.msra.mxu0 %v612
    %764 = vmatprep.subr.mxu0 %v616
    %765 = vmatpush1.msra.mxu0 %v615
    %766 = vmatprep.subr.mxu0 %v619
    %767 = vmatpush1.msra.mxu0 %v618
    %768 = vmatprep.subr.mxu0 %v622
    %769 = vmatpush1.msra.mxu0 %v621
    %770 = vmatprep.subr.mxu0 %v625
    %771 = vmatpush1.msra.mxu0 %v624
    %772 = vmatprep.subr.mxu0 %v628
    %773 = vmatpush1.msra.mxu0 %v627
    %774 = vmatprep.subr.mxu0 %v631
    %775 = vmatpush1.msra.mxu0 %v630
    %776 = vmatprep.subr.mxu0 %v634
    %777 = vmatpush1.msra.mxu0 %v633
    %778 = vmatprep.subr.mxu0 %v637
    %779 = vmatpush1.msra.mxu0 %v636
    %780 = vmatprep.subr.mxu0 %v640
    %781 = vmatpush1.msra.mxu0 %v639
    %782 = vmatprep.subr.mxu0 %v643
    %783 = vmatpush1.msra.mxu0 %v642
    %784 = vmatprep.subr.mxu0 %v646
    %785 = vmatpush1.msra.mxu0 %v645
    %786 = vmatprep.subr.mxu0 %v649
    %787 = vmatpush1.msra.mxu0 %v648
    %788 = vmatprep.subr.mxu0 %v652
    %789 = vmatpush1.msra.mxu0 %v651
    %790 = vmatprep.subr.mxu0 %v655
    %791 = vmatpush1.msra.mxu0 %v654
    %792 = vmatprep.subr.mxu0 %v658
    %793 = vmatpush1.msra.mxu0 %v657
    %794 = vmatprep.subr.mxu0 %v661
    %795 = vmatpush1.msra.mxu0 %v660
    %796 = vmatprep.subr.mxu0 %v664
    %797 = vmatpush1.msra.mxu0 %v663
    %798 = vmatprep.subr.mxu0 %v667
    %799 = vmatpush1.msra.mxu0 %v666
    %800 = vmatprep.subr.mxu0 %v670
    %801 = vmatpush1.msra.mxu0 %v669
    %802 = vmatprep.subr.mxu0 %v673
    %803 = vmatpush1.msra.mxu0 %v672
    %804 = vmatprep.subr.mxu0 %v676
    %805 = vmatpush1.msra.mxu0 %v675
    %806 = vmatprep.mubr.f32.mxu0 %v580
    %807 = vmatmul.mubr.f32.gmra.mrb[0].mxu0 %v579
    %v808 = vpop.f32.mrb[0].mxu0
    %v809 = vadd.f32 %v730, %v808
    %v810 = vpop.f32.mrb[0].mxu0
    %v811 = vadd.f32 %v734, %v810
    %812 = vdwg.mxu0
    %813 = vmatprep.subr.mxu0 %v679
    %814 = vmatpush1.msra.mxu0 %v678
    %815 = vmatprep.subr.mxu0 %v682
    %816 = vmatpush1.msra.mxu0 %v681
    %817 = vmatprep.subr.mxu0 %v685
    %818 = vmatpush1.msra.mxu0 %v684
    %819 = vmatprep.subr.mxu0 %v688
    %820 = vmatpush1.msra.mxu0 %v687
    %821 = vmatprep.subr.mxu0 %v691
    %822 = vmatpush1.msra.mxu0 %v690
    %823 = vmatprep.subr.mxu0 %v694
    %824 = vmatpush1.msra.mxu0 %v693
    %825 = vmatprep.subr.mxu0 %v697
    %826 = vmatpush1.msra.mxu0 %v696
    %827 = vmatprep.subr.mxu0 %v700
    %828 = vmatpush1.msra.mxu0 %v699
    %829 = vmatprep.subr.mxu0 %v703
    %830 = vmatpush1.msra.mxu0 %v702
    %831 = vmatprep.subr.mxu0 %v706
    %832 = vmatpush1.msra.mxu0 %v705
    %833 = vmatprep.subr.mxu0 %v709
    %834 = vmatpush1.msra.mxu0 %v708
    %835 = vmatprep.subr.mxu0 %v712
    %836 = vmatpush1.msra.mxu0 %v711
    %837 = vmatprep.subr.mxu0 %v715
    %838 = vmatpush1.msra.mxu0 %v714
    %839 = vmatprep.subr.mxu0 %v718
    %840 = vmatpush1.msra.mxu0 %v717
    %841 = vmatprep.subr.mxu0 %v721
    %842 = vmatpush1.msra.mxu0 %v720
    %843 = vmatprep.subr.mxu0 %v724
    %844 = vmatpush1.msra.mxu0 %v723
    %845 = vmatprep.subr.mxu0 0.0
    %846 = vmatpush1.msra.mxu0 0.0
    %847 = vmatprep.subr.mxu0 0.0
    %848 = vmatpush1.msra.mxu0 0.0
    %849 = vmatprep.subr.mxu0 0.0
    %850 = vmatpush1.msra.mxu0 0.0
    %851 = vmatprep.subr.mxu0 0.0
    %852 = vmatpush1.msra.mxu0 0.0
    %853 = vmatprep.subr.mxu0 0.0
    %854 = vmatpush1.msra.mxu0 0.0
    %855 = vmatprep.subr.mxu0 0.0
    %856 = vmatpush1.msra.mxu0 0.0
    %857 = vmatprep.subr.mxu0 0.0
    %858 = vmatpush1.msra.mxu0 0.0
    %859 = vmatprep.subr.mxu0 0.0
    %860 = vmatpush1.msra.mxu0 0.0
    %861 = vmatprep.subr.mxu0 0.0
    %862 = vmatpush1.msra.mxu0 0.0
    %863 = vmatprep.subr.mxu0 0.0
    %864 = vmatpush1.msra.mxu0 0.0
    %865 = vmatprep.subr.mxu0 0.0
    %866 = vmatpush1.msra.mxu0 0.0
    %867 = vmatprep.subr.mxu0 0.0
    %868 = vmatpush1.msra.mxu0 0.0
    %869 = vmatprep.subr.mxu0 0.0
    %870 = vmatpush1.msra.mxu0 0.0
    %871 = vmatprep.subr.mxu0 0.0
    %872 = vmatpush1.msra.mxu0 0.0
    %873 = vmatprep.subr.mxu0 0.0
    %874 = vmatpush1.msra.mxu0 0.0
    %875 = vmatprep.subr.mxu0 0.0
    %876 = vmatpush1.msra.mxu0 0.0
    %877 = vmatprep.mubr.f32.mxu0 0.0
    %878 = vmatmul.mubr.f32.gmra.mrb[0].mxu0 %v581
    %v879 = vpop.f32.mrb[0].mxu0
    %v880 = vadd.f32 %v809, %v879
    %v881 = vpop.f32.mrb[0].mxu0
    %v882 = vadd.f32 %v811, %v881
    %883 = vdwg.mxu0
    %884 = vmatprep.subr.mxu0 0.0
    %885 = vmatpush1.msra.mxu0 %v584
    %886 = vmatprep.subr.mxu0 0.0
    %887 = vmatpush1.msra.mxu0 %v587
    %888 = vmatprep.subr.mxu0 0.0
    %889 = vmatpush1.msra.mxu0 %v590
    %890 = vmatprep.subr.mxu0 0.0
    %891 = vmatpush1.msra.mxu0 %v593
    %892 = vmatprep.subr.mxu0 0.0
    %893 = vmatpush1.msra.mxu0 %v596
    %894 = vmatprep.subr.mxu0 0.0
    %895 = vmatpush1.msra.mxu0 %v599
    %896 = vmatprep.subr.mxu0 0.0
    %897 = vmatpush1.msra.mxu0 %v602
    %898 = vmatprep.subr.mxu0 0.0
    %899 = vmatpush1.msra.mxu0 %v605
    %900 = vmatprep.subr.mxu0 0.0
    %901 = vmatpush1.msra.mxu0 %v608
    %902 = vmatprep.subr.mxu0 0.0
    %903 = vmatpush1.msra.mxu0 %v611
    %904 = vmatprep.subr.mxu0 0.0
    %905 = vmatpush1.msra.mxu0 %v614
    %906 = vmatprep.subr.mxu0 0.0
    %907 = vmatpush1.msra.mxu0 %v617
    %908 = vmatprep.subr.mxu0 0.0
    %909 = vmatpush1.msra.mxu0 %v620
    %910 = vmatprep.subr.mxu0 0.0
    %911 = vmatpush1.msra.mxu0 %v623
    %912 = vmatprep.subr.mxu0 0.0
    %913 = vmatpush1.msra.mxu0 %v626
    %914 = vmatprep.subr.mxu0 0.0
    %915 = vmatpush1.msra.mxu0 %v629
    %916 = vmatprep.subr.mxu0 0.0
    %917 = vmatpush1.msra.mxu0 %v632
    %918 = vmatprep.subr.mxu0 0.0
    %919 = vmatpush1.msra.mxu0 %v635
    %920 = vmatprep.subr.mxu0 0.0
    %921 = vmatpush1.msra.mxu0 %v638
    %922 = vmatprep.subr.mxu0 0.0
    %923 = vmatpush1.msra.mxu0 %v641
    %924 = vmatprep.subr.mxu0 0.0
    %925 = vmatpush1.msra.mxu0 %v644
    %926 = vmatprep.subr.mxu0 0.0
    %927 = vmatpush1.msra.mxu0 %v647
    %928 = vmatprep.subr.mxu0 0.0
    %929 = vmatpush1.msra.mxu0 %v650
    %930 = vmatprep.subr.mxu0 0.0
    %931 = vmatpush1.msra.mxu0 %v653
    %932 = vmatprep.subr.mxu0 0.0
    %933 = vmatpush1.msra.mxu0 %v656
    %934 = vmatprep.subr.mxu0 0.0
    %935 = vmatpush1.msra.mxu0 %v659
    %936 = vmatprep.subr.mxu0 0.0
    %937 = vmatpush1.msra.mxu0 %v662
    %938 = vmatprep.subr.mxu0 0.0
    %939 = vmatpush1.msra.mxu0 %v665
    %940 = vmatprep.subr.mxu0 0.0
    %941 = vmatpush1.msra.mxu0 %v668
    %942 = vmatprep.subr.mxu0 0.0
    %943 = vmatpush1.msra.mxu0 %v671
    %944 = vmatprep.subr.mxu0 0.0
    %945 = vmatpush1.msra.mxu0 %v674
    %946 = vmatprep.subr.mxu0 0.0
    %947 = vmatpush1.msra.mxu0 %v677
    %948 = vmatprep.mubr.f32.mxu0 %v580
    %949 = vmatmul.mubr.f32.gmra.mrb[0].mxu0 %v579
    %v950 = vpop.f32.mrb[0].mxu0
    %v951 = vadd.f32 %v738, %v950
    %v952 = vpop.f32.mrb[0].mxu0
    %953 = vdwg.mxu0
    %954 = vmatprep.subr.mxu0 0.0
    %955 = vmatpush1.msra.mxu0 %v680
    %956 = vmatprep.subr.mxu0 0.0
    %957 = vmatpush1.msra.mxu0 %v683
    %958 = vmatprep.subr.mxu0 0.0
    %959 = vmatpush1.msra.mxu0 %v686
    %960 = vmatprep.subr.mxu0 0.0
    %961 = vmatpush1.msra.mxu0 %v689
    %962 = vmatprep.subr.mxu0 0.0
    %963 = vmatpush1.msra.mxu0 %v692
    %964 = vmatprep.subr.mxu0 0.0
    %965 = vmatpush1.msra.mxu0 %v695
    %966 = vmatprep.subr.mxu0 0.0
    %967 = vmatpush1.msra.mxu0 %v698
    %968 = vmatprep.subr.mxu0 0.0
    %969 = vmatpush1.msra.mxu0 %v701
    %970 = vmatprep.subr.mxu0 0.0
    %971 = vmatpush1.msra.mxu0 %v704
    %972 = vmatprep.subr.mxu0 0.0
    %973 = vmatpush1.msra.mxu0 %v707
    %974 = vmatprep.subr.mxu0 0.0
    %975 = vmatpush1.msra.mxu0 %v710
    %976 = vmatprep.subr.mxu0 0.0
    %977 = vmatpush1.msra.mxu0 %v713
    %978 = vmatprep.subr.mxu0 0.0
    %979 = vmatpush1.msra.mxu0 %v716
    %980 = vmatprep.subr.mxu0 0.0
    %981 = vmatpush1.msra.mxu0 %v719
    %982 = vmatprep.subr.mxu0 0.0
    %983 = vmatpush1.msra.mxu0 %v722
    %984 = vmatprep.subr.mxu0 0.0
    %985 = vmatpush1.msra.mxu0 %v725
    %986 = vmatprep.subr.mxu0 0.0
    %987 = vmatpush1.msra.mxu0 0.0
    %988 = vmatprep.subr.mxu0 0.0
    %989 = vmatpush1.msra.mxu0 0.0
    %990 = vmatprep.subr.mxu0 0.0
    %991 = vmatpush1.msra.mxu0 0.0
    %992 = vmatprep.subr.mxu0 0.0
    %993 = vmatpush1.msra.mxu0 0.0
    %994 = vmatprep.subr.mxu0 0.0
    %995 = vmatpush1.msra.mxu0 0.0
    %996 = vmatprep.subr.mxu0 0.0
    %997 = vmatpush1.msra.mxu0 0.0
    %998 = vmatprep.subr.mxu0 0.0
    %999 = vmatpush1.msra.mxu0 0.0
    %1000 = vmatprep.subr.mxu0 0.0
    %1001 = vmatpush1.msra.mxu0 0.0
    %1002 = vmatprep.subr.mxu0 0.0
    %1003 = vmatpush1.msra.mxu0 0.0
    %1004 = vmatprep.subr.mxu0 0.0
    %1005 = vmatpush1.msra.mxu0 0.0
    %1006 = vmatprep.subr.mxu0 0.0
    %1007 = vmatpush1.msra.mxu0 0.0
    %1008 = vmatprep.subr.mxu0 0.0
    %1009 = vmatpush1.msra.mxu0 0.0
    %1010 = vmatprep.subr.mxu0 0.0
    %1011 = vmatpush1.msra.mxu0 0.0
    %1012 = vmatprep.subr.mxu0 0.0
    %1013 = vmatpush1.msra.mxu0 0.0
    %1014 = vmatprep.subr.mxu0 0.0
    %1015 = vmatpush1.msra.mxu0 0.0
    %1016 = vmatprep.subr.mxu0 0.0
    %1017 = vmatpush1.msra.mxu0 0.0
    %1018 = vmatprep.mubr.f32.mxu0 0.0
    %1019 = vmatmul.mubr.f32.gmra.mrb[0].mxu0 %v581
    %v1020 = vpop.f32.mrb[0].mxu0
    %v1021 = vadd.f32 %v951, %v1020
    %v1022 = vpop.f32.mrb[0].mxu0
    %1023 = vdwg.mxu0
    %s1024 = scalar_lea.vmem [#allocation4], 7
    %v1025 = vld [vmem:[%s1024] ss:$8 sm:$0x7]
    %s1026 = scalar_lea.vmem [#allocation4], 24
    %v1027 = vld [vmem:[%s1026] ss:$8 sm:$0x7]
    %v1028 = vld [vmem:[#allocation4 + $0x19] ss:$0 sm:$0xff]
    %v1029 = vlaneseq
    %v1030 = vshrl.u32 %v1029, 7
    %v1031 = vsub.s32 0, %v1030
    %v1032 = vrot.slane %v880, %v1031
    %v1033 = vlaneseq
    %v1034 = vshrl.u32 %v1033, 7
    %v1035 = vsub.s32 0, %v1034
    %v1036 = vrot.slane %v882, %v1035
    %v1037 = vlaneseq
    %v1038 = vshrl.u32 %v1037, 7
    %v1039 = vsub.s32 0, %v1038
    %v1040 = vrot.slane %v1021, %v1039
    %v1041 = vmul.f32 %v444, %v1032
    %v1042 = vmul.f32 %v445, %v1036
    %v1043 = vmul.f32 %v446, %v1040
    %v1044 = vmul.f32 %v1041, %v1032
    %v1045 = vmul.f32 %v1042, %v1036
    %v1046 = vmul.f32 %v1043, %v1040
    %v1047 = vadd.f32 %v1041, %v1042
    %v1048 = vadd.f32 %v1047, %v1043
    %1049 = vadd.xlane.f32.xlu0 %v1048
    %v1050 = vpop.xlane.xlu0 %1049
    %v1051 = vadd.f32 %v1044, %v1045
    %v1052 = vadd.f32 %v1051, %v1046
    %1053 = vadd.xlane.f32.xlu0 %v1052
    %v1054 = vpop.xlane.xlu0 %1053
    %v1055 = vmul.f32 %v1050, 0.023809524
    %v1056 = vmul.f32 %v1054, 0.023809524
    %v1057 = vmul.f32 %v1055, %v1055
    %v1058 = vsub.f32 %v1056, %v1057
    %v1059 = vmax.f32 %v1058, 0.0
    %v1060 = vadd.f32 %v1059, 1e-05
    %v1061 = vrsqrt.pop %v1060
    %v1062 = vmul.f32 %v1061, %v444
    %v1063 = vmul.f32 %v1061, %v445
    %v1064 = vmul.f32 %v1061, %v446
    %v1065 = vmul.f32 %v1055, %v1061
    %v1066 = vmul.f32 %v1065, %v444
    %v1067 = vmul.f32 %v1065, %v445
    %v1068 = vmul.f32 %v1065, %v446
    %v1069 = vrot.slane %v1062, 4
    %v1070 = vadd.f32 %v1062, %v1069
    %v1071 = vrot.slane %v1070, 2
    %v1072 = vadd.f32 %v1070, %v1071
    %v1073 = vrot.slane %v1072, 1
    %v1074 = vadd.f32 %v1072, %v1073
    %v1075 = vrot.slane %v1063, 4
    %v1076 = vadd.f32 %v1063, %v1075
    %v1077 = vrot.slane %v1076, 2
    %v1078 = vadd.f32 %v1076, %v1077
    %v1079 = vrot.slane %v1078, 1
    %v1080 = vadd.f32 %v1078, %v1079
    %v1081 = vrot.slane %v1064, 4
    %v1082 = vadd.f32 %v1064, %v1081
    %v1083 = vrot.slane %v1082, 2
    %v1084 = vadd.f32 %v1082, %v1083
    %v1085 = vrot.slane %v1084, 1
    %v1086 = vadd.f32 %v1084, %v1085
    %v1087 = vrot.slane %v1066, 4
    %v1088 = vadd.f32 %v1066, %v1087
    %v1089 = vrot.slane %v1088, 2
    %v1090 = vadd.f32 %v1088, %v1089
    %v1091 = vrot.slane %v1090, 1
    %v1092 = vadd.f32 %v1090, %v1091
    %v1093 = vrot.slane %v1067, 4
    %v1094 = vadd.f32 %v1067, %v1093
    %v1095 = vrot.slane %v1094, 2
    %v1096 = vadd.f32 %v1094, %v1095
    %v1097 = vrot.slane %v1096, 1
    %v1098 = vadd.f32 %v1096, %v1097
    %v1099 = vrot.slane %v1068, 4
    %v1100 = vadd.f32 %v1068, %v1099
    %v1101 = vrot.slane %v1100, 2
    %v1102 = vadd.f32 %v1100, %v1101
    %v1103 = vrot.slane %v1102, 1
    %v1104 = vadd.f32 %v1102, %v1103
    %v1105 = vmul.f32 %v880, %v1074
    %v1106 = vmul.f32 %v882, %v1080
    %v1107 = vmul.f32 %v1021, %v1086
    %v1108 = vsub.f32 %v1105, %v1092
    %v1109 = vsub.f32 %v1106, %v1098
    %v1110 = vsub.f32 %v1107, %v1104
    %v1112 = vlaneseq
    %v1113 = vshrl.u32 %v1112, 7
    %v1114 = vsub.s32 0, %v1113
    %v1115 = vrot.slane %v1025, %v1114
    %v1116 = vlaneseq
    %v1117 = vshrl.u32 %v1116, 7
    %v1118 = vsub.s32 1, %v1117
    %v1119 = vrot.slane %v1025, %v1118
    %v1120 = vlaneseq
    %v1121 = vshrl.u32 %v1120, 7
    %v1122 = vsub.s32 2, %v1121
    %v1123 = vrot.slane %v1025, %v1122
    %v1127 = vmul.f32 %v1108, %v1115
    %v1128 = vmul.f32 %v1109, %v1119
    %v1129 = vmul.f32 %v1110, %v1123
    %v1131 = vlaneseq
    %v1132 = vshrl.u32 %v1131, 7
    %v1133 = vsub.s32 0, %v1132
    %v1134 = vrot.slane %v1027, %v1133
    %v1135 = vlaneseq
    %v1136 = vshrl.u32 %v1135, 7
    %v1137 = vsub.s32 1, %v1136
    %v1138 = vrot.slane %v1027, %v1137
    %v1139 = vlaneseq
    %v1140 = vshrl.u32 %v1139, 7
    %v1141 = vsub.s32 2, %v1140
    %v1142 = vrot.slane %v1027, %v1141
    %v1146 = vadd.f32 %v1127, %v1134
    %v1147 = vadd.f32 %v1128, %v1138
    %v1148 = vadd.f32 %v1129, %v1142
    %vm1149 = vcmp.ge.f32.partialorder %v1146, 0.0
    %vm1150 = vcmp.ge.f32.partialorder %v1147, 0.0
    %vm1151 = vcmp.ge.f32.partialorder %v1148, 0.0
    %v1152 = vmul.f32 %v1146, 0.2
    %v1153 = vmul.f32 %v1147, 0.2
    %v1154 = vmul.f32 %v1148, 0.2
    %v1155 = vsel %vm1149, %v1146, %v1152
    %v1156 = vsel %vm1150, %v1147, %v1153
    %v1157 = vsel %vm1151, %v1148, %v1154
    %v1158 = vld [vmem:[#allocation12] sm:$0xff]
    %v1159 = vld [vmem:[#allocation12 + $0x8] sm:$0xff]
    %v1160 = vld [vmem:[#allocation12 + $0x10] sm:$0xff]
    %v1161 = vld [vmem:[#allocation12 + $0x18] sm:$0xff]
    %v1162 = vld [vmem:[#allocation12 + $0x20] sm:$0xff]
    %v1163 = vld [vmem:[#allocation12 + $0x28] sm:$0xff]
    %v1164 = vld [vmem:[#allocation12 + $0x30] sm:$0xff]
    %v1165 = vld [vmem:[#allocation12 + $0x38] sm:$0xff]
    %v1166 = vld [vmem:[#allocation12 + $0x40] sm:$0xff]
    %v1167 = vld [vmem:[#allocation12 + $0x48] sm:$0xff]
    %v1168 = vld [vmem:[#allocation12 + $0x50] sm:$0xff]
    %v1169 = vld [vmem:[#allocation12 + $0x58] sm:$0xff]
    %v1170 = vld [vmem:[#allocation12 + $0x60] sm:$0xff]
    %v1171 = vld [vmem:[#allocation12 + $0x68] sm:$0xff]
    %v1172 = vld [vmem:[#allocation12 + $0x70] sm:$0xff]
    %v1173 = vld [vmem:[#allocation12 + $0x78] sm:$0xff]
    %v1174 = vld [vmem:[#allocation12 + $0x80] sm:$0xff]
    %v1175 = vld [vmem:[#allocation12 + $0x88] sm:$0xff]
    %v1176 = vld [vmem:[#allocation12 + $0x90] sm:$0xff]
    %v1177 = vld [vmem:[#allocation12 + $0x98] sm:$0xff]
    %v1178 = vld [vmem:[#allocation12 + $0xa0] sm:$0xff]
    %v1179 = vld [vmem:[#allocation12 + $0xa8] sm:$0xff]
    %v1180 = vld [vmem:[#allocation12 + $0xb0] sm:$0xff]
    %v1181 = vld [vmem:[#allocation12 + $0xb8] sm:$0xff]
    %v1182 = vld [vmem:[#allocation12 + $0xc0] sm:$0xff]
    %v1183 = vld [vmem:[#allocation12 + $0xc8] sm:$0xff]
    %v1184 = vld [vmem:[#allocation12 + $0xd0] sm:$0xff]
    %v1185 = vld [vmem:[#allocation12 + $0xd8] sm:$0xff]
    %v1186 = vld [vmem:[#allocation12 + $0xe0] sm:$0xff]
    %v1187 = vld [vmem:[#allocation12 + $0xe8] sm:$0xff]
    %v1188 = vld [vmem:[#allocation12 + $0xf0] sm:$0xff]
    %v1189 = vld [vmem:[#allocation12 + $0xf8] sm:$0xff]
    %v1190 = vld [vmem:[#allocation12 + $0x100] sm:$0xff]
    %v1191 = vld [vmem:[#allocation12 + $0x108] sm:$0xff]
    %v1192 = vld [vmem:[#allocation12 + $0x110] sm:$0xff]
    %v1193 = vld [vmem:[#allocation12 + $0x118] sm:$0xff]
    %v1194 = vld [vmem:[#allocation12 + $0x120] sm:$0xff]
    %v1195 = vld [vmem:[#allocation12 + $0x128] sm:$0xff]
    %v1196 = vld [vmem:[#allocation12 + $0x130] sm:$0xff]
    %v1197 = vld [vmem:[#allocation12 + $0x138] sm:$0xff]
    %v1198 = vld [vmem:[#allocation12 + $0x140] sm:$0xff]
    %v1199 = vld [vmem:[#allocation12 + $0x148] sm:$0xff]
    %v1200 = vld [vmem:[#allocation12 + $0x150] sm:$0xff]
    %v1201 = vld [vmem:[#allocation12 + $0x158] sm:$0xff]
    %v1202 = vld [vmem:[#allocation12 + $0x160] sm:$0xff]
    %v1203 = vld [vmem:[#allocation12 + $0x168] sm:$0xff]
    %v1204 = vld [vmem:[#allocation12 + $0x170] sm:$0xff]
    %v1205 = vld [vmem:[#allocation12 + $0x178] sm:$0xff]
    %1206 = vmatprep.subr.mxu0 0.0
    %1207 = vmatpush1.msra.mxu0 %v1158
    %1208 = vmatprep.subr.mxu0 0.0
    %1209 = vmatpush1.msra.mxu0 %v1159
    %1210 = vmatprep.subr.mxu0 0.0
    %1211 = vmatpush1.msra.mxu0 %v1160
    %1212 = vmatprep.subr.mxu0 0.0
    %1213 = vmatpush1.msra.mxu0 %v1161
    %1214 = vmatprep.subr.mxu0 0.0
    %1215 = vmatpush1.msra.mxu0 %v1162
    %1216 = vmatprep.subr.mxu0 0.0
    %1217 = vmatpush1.msra.mxu0 %v1163
    %1218 = vmatprep.subr.mxu0 0.0
    %1219 = vmatpush1.msra.mxu0 %v1164
    %1220 = vmatprep.subr.mxu0 0.0
    %1221 = vmatpush1.msra.mxu0 %v1165
    %1222 = vmatprep.subr.mxu0 0.0
    %1223 = vmatpush1.msra.mxu0 %v1166
    %1224 = vmatprep.subr.mxu0 0.0
    %1225 = vmatpush1.msra.mxu0 %v1167
    %1226 = vmatprep.subr.mxu0 0.0
    %1227 = vmatpush1.msra.mxu0 %v1168
    %1228 = vmatprep.subr.mxu0 0.0
    %1229 = vmatpush1.msra.mxu0 %v1169
    %1230 = vmatprep.subr.mxu0 0.0
    %1231 = vmatpush1.msra.mxu0 %v1170
    %1232 = vmatprep.subr.mxu0 0.0
    %1233 = vmatpush1.msra.mxu0 %v1171
    %1234 = vmatprep.subr.mxu0 0.0
    %1235 = vmatpush1.msra.mxu0 %v1172
    %1236 = vmatprep.subr.mxu0 0.0
    %1237 = vmatpush1.msra.mxu0 %v1173
    %1238 = vmatprep.subr.mxu0 0.0
    %1239 = vmatpush1.msra.mxu0 %v1174
    %1240 = vmatprep.subr.mxu0 0.0
    %1241 = vmatpush1.msra.mxu0 %v1175
    %1242 = vmatprep.subr.mxu0 0.0
    %1243 = vmatpush1.msra.mxu0 %v1176
    %1244 = vmatprep.subr.mxu0 0.0
    %1245 = vmatpush1.msra.mxu0 %v1177
    %1246 = vmatprep.subr.mxu0 0.0
    %1247 = vmatpush1.msra.mxu0 %v1178
    %1248 = vmatprep.subr.mxu0 0.0
    %1249 = vmatpush1.msra.mxu0 %v1179
    %1250 = vmatprep.subr.mxu0 0.0
    %1251 = vmatpush1.msra.mxu0 %v1180
    %1252 = vmatprep.subr.mxu0 0.0
    %1253 = vmatpush1.msra.mxu0 %v1181
    %1254 = vmatprep.subr.mxu0 0.0
    %1255 = vmatpush1.msra.mxu0 %v1182
    %1256 = vmatprep.subr.mxu0 0.0
    %1257 = vmatpush1.msra.mxu0 %v1183
    %1258 = vmatprep.subr.mxu0 0.0
    %1259 = vmatpush1.msra.mxu0 %v1184
    %1260 = vmatprep.subr.mxu0 0.0
    %1261 = vmatpush1.msra.mxu0 %v1185
    %1262 = vmatprep.subr.mxu0 0.0
    %1263 = vmatpush1.msra.mxu0 %v1186
    %1264 = vmatprep.subr.mxu0 0.0
    %1265 = vmatpush1.msra.mxu0 %v1187
    %1266 = vmatprep.subr.mxu0 0.0
    %1267 = vmatpush1.msra.mxu0 %v1188
    %1268 = vmatprep.subr.mxu0 0.0
    %1269 = vmatpush1.msra.mxu0 %v1189
    %1270 = vmatprep.mubr.f32.mxu0 %v1156
    %1271 = vmatmul.mubr.f32.gmra.mrb[0].mxu0 %v1155
    %v1272 = vpop.f32.mrb[0].mxu0
    %v1273 = vadd.f32 %v1028, %v1272
    %v1274 = vpop.f32.mrb[0].mxu0
    %1275 = vdwg.mxu0
    %1276 = vmatprep.subr.mxu0 0.0
    %1277 = vmatpush1.msra.mxu0 %v1190
    %1278 = vmatprep.subr.mxu0 0.0
    %1279 = vmatpush1.msra.mxu0 %v1191
    %1280 = vmatprep.subr.mxu0 0.0
    %1281 = vmatpush1.msra.mxu0 %v1192
    %1282 = vmatprep.subr.mxu0 0.0
    %1283 = vmatpush1.msra.mxu0 %v1193
    %1284 = vmatprep.subr.mxu0 0.0
    %1285 = vmatpush1.msra.mxu0 %v1194
    %1286 = vmatprep.subr.mxu0 0.0
    %1287 = vmatpush1.msra.mxu0 %v1195
    %1288 = vmatprep.subr.mxu0 0.0
    %1289 = vmatpush1.msra.mxu0 %v1196
    %1290 = vmatprep.subr.mxu0 0.0
    %1291 = vmatpush1.msra.mxu0 %v1197
    %1292 = vmatprep.subr.mxu0 0.0
    %1293 = vmatpush1.msra.mxu0 %v1198
    %1294 = vmatprep.subr.mxu0 0.0
    %1295 = vmatpush1.msra.mxu0 %v1199
    %1296 = vmatprep.subr.mxu0 0.0
    %1297 = vmatpush1.msra.mxu0 %v1200
    %1298 = vmatprep.subr.mxu0 0.0
    %1299 = vmatpush1.msra.mxu0 %v1201
    %1300 = vmatprep.subr.mxu0 0.0
    %1301 = vmatpush1.msra.mxu0 %v1202
    %1302 = vmatprep.subr.mxu0 0.0
    %1303 = vmatpush1.msra.mxu0 %v1203
    %1304 = vmatprep.subr.mxu0 0.0
    %1305 = vmatpush1.msra.mxu0 %v1204
    %1306 = vmatprep.subr.mxu0 0.0
    %1307 = vmatpush1.msra.mxu0 %v1205
    %1308 = vmatprep.subr.mxu0 0.0
    %1309 = vmatpush1.msra.mxu0 0.0
    %1310 = vmatprep.subr.mxu0 0.0
    %1311 = vmatpush1.msra.mxu0 0.0
    %1312 = vmatprep.subr.mxu0 0.0
    %1313 = vmatpush1.msra.mxu0 0.0
    %1314 = vmatprep.subr.mxu0 0.0
    %1315 = vmatpush1.msra.mxu0 0.0
    %1316 = vmatprep.subr.mxu0 0.0
    %1317 = vmatpush1.msra.mxu0 0.0
    %1318 = vmatprep.subr.mxu0 0.0
    %1319 = vmatpush1.msra.mxu0 0.0
    %1320 = vmatprep.subr.mxu0 0.0
    %1321 = vmatpush1.msra.mxu0 0.0
    %1322 = vmatprep.subr.mxu0 0.0
    %1323 = vmatpush1.msra.mxu0 0.0
    %1324 = vmatprep.subr.mxu0 0.0
    %1325 = vmatpush1.msra.mxu0 0.0
    %1326 = vmatprep.subr.mxu0 0.0
    %1327 = vmatpush1.msra.mxu0 0.0
    %1328 = vmatprep.subr.mxu0 0.0
    %1329 = vmatpush1.msra.mxu0 0.0
    %1330 = vmatprep.subr.mxu0 0.0
    %1331 = vmatpush1.msra.mxu0 0.0
    %1332 = vmatprep.subr.mxu0 0.0
    %1333 = vmatpush1.msra.mxu0 0.0
    %1334 = vmatprep.subr.mxu0 0.0
    %1335 = vmatpush1.msra.mxu0 0.0
    %1336 = vmatprep.subr.mxu0 0.0
    %1337 = vmatpush1.msra.mxu0 0.0
    %1338 = vmatprep.subr.mxu0 0.0
    %1339 = vmatpush1.msra.mxu0 0.0
    %1340 = vmatprep.mubr.f32.mxu0 0.0
    %1341 = vmatmul.mubr.f32.gmra.mrb[0].mxu0 %v1157
    %v1342 = vpop.f32.mrb[0].mxu0
    %v1343 = vadd.f32 %v1273, %v1342
    %v1344 = vpop.f32.mrb[0].mxu0
    %1345 = vdwg.mxu0
    %1346 = vst [vmem:[%s8] sm:$0x1] %v1343
    // Predicated region
    $region62: #{gen_phi_forward.1} parent=1 // pred_check
      _
    $region63: #{gen_phi_forward.1} parent=1 // pred_check_branch
      %1348 = sbr.rel (0) target = $region65
    $region64: #{gen_phi_forward.1} parent=1 // pred_region
      _
    $region65: #{gen_phi_forward.1} parent=1 // pred_fallthru
      _
    // Predicated region
    $region66: #{gen_phi_forward.1} parent=1 // pred_check
      _
    $region67: #{gen_phi_forward.1} parent=1 // pred_check_branch
      %1350 = sbr.rel (0) target = $region69
    $region68: #{gen_phi_forward.1} parent=1 // pred_region
      _
    $region69: #{gen_phi_forward.1} parent=1 // pred_fallthru
      _
    %1351 = vsyncpa [#allocation3], 1
    %1352 = vsyncpa [#allocation5], 1
    %1353 = vsyncpa [#allocation8], 1
    %1354 = vsyncpa [#allocation11], 1

</llo_original>
